<compile_context>
chip_gen: v7x
topology: tpu7x:2x2x1
jax: 0.10.0
libtpu: 0.0.40
codegen_flags: <defaults>
</compile_context>

<pallas_src>
import jax
import jax.numpy as jnp
from jax.experimental import pallas as pl
from jax.experimental.pallas import tpu as pltpu


_COMPUTE_DTYPE = jnp.bfloat16  # MXU operand dtype; accumulation is always f32.


def _round_up(x, m):
    return ((x + m - 1) // m) * m


# ---------------------------------------------------------------------------
# Kernel
# ---------------------------------------------------------------------------
def _expert_mlp_kernel(x_ref, w1_ref, b1_ref, w2_ref, b2_ref, w3_ref, b3_ref, o_ref):
    """Fused Linear->ReLU->Linear->ReLU->Linear for one batch tile.

    x arrives f32 (no wrapper-side cast pass) and is cast to the MXU operand
    dtype here; accumulation, bias-add and ReLU run in f32 on the VPU.
    Intermediates are cast back to bf16 only where they feed the next matmul.
    """
    cdt = w1_ref.dtype
    x = x_ref[...].astype(cdt)
    # layer 1: Linear + ReLU
    h1 = jnp.dot(x, w1_ref[...], preferred_element_type=jnp.float32) + b1_ref[...]
    h1 = jnp.maximum(h1, 0.0).astype(cdt)
    # layer 2: Linear + ReLU
    h2 = jnp.dot(h1, w2_ref[...], preferred_element_type=jnp.float32) + b2_ref[...]
    h2 = jnp.maximum(h2, 0.0).astype(cdt)
    # output layer: Linear (no activation)
    out = jnp.dot(h2, w3_ref[...], preferred_element_type=jnp.float32) + b3_ref[...]
    o_ref[...] = out.astype(o_ref.dtype)


# ---------------------------------------------------------------------------
# One-time parameter preparation (hoisted out of the per-call path)
# ---------------------------------------------------------------------------
def prepare_expert_params(params, compute_dtype=_COMPUTE_DTYPE):
    """Pad feature dims to multiples of 128 and cast weights to bf16, ONCE.

    Zero padding is inert: padded input lanes hit zero weight rows, padded
    hidden lanes are bias-0 -> ReLU(0)=0 -> multiply zero weight rows of the
    next layer.  Biases must stay zero-padded if this is refactored.
    """
    (w1, b1), (w2, b2), (w3, b3) = params
    Din, H1 = w1.shape
    H2 = w2.shape[1]
    Dout = w3.shape[1]
    Din_p, H1_p, H2_p, Dout_p = (_round_up(d, 128) for d in (Din, H1, H2, Dout))

    def pad2(a, rows, cols, dtype):
        return jnp.pad(a, ((0, rows - a.shape[0]), (0, cols - a.shape[1]))).astype(dtype)

    return {
        "w1": pad2(w1, Din_p, H1_p, compute_dtype),
        "b1": pad2(b1.reshape(1, -1), 1, H1_p, jnp.float32),
        "w2": pad2(w2, H1_p, H2_p, compute_dtype),
        "b2": pad2(b2.reshape(1, -1), 1, H2_p, jnp.float32),
        "w3": pad2(w3, H2_p, Dout_p, compute_dtype),
        "b3": pad2(b3.reshape(1, -1), 1, Dout_p, jnp.float32),
        "dims": (Din, H1, H2, Dout),  # logical (unpadded) dims
    }


# ---------------------------------------------------------------------------
# Wrapper
# ---------------------------------------------------------------------------
def _vmem_estimate_bytes(tile, din, h1, h2, dout, weight_bufs):
    bf16, f32 = 2, 4
    weights = weight_bufs * (din * h1 + h1 * h2 + h2 * dout) * bf16
    biases = weight_bufs * (h1 + h2 + dout) * f32
    io = 2 * (tile * din * f32 + tile * dout * f32)      # double-buffered x / out
    inter = tile * (h1 + h2) * (f32 + bf16)              # live h1/h2 (f32 accum + bf16)
    return weights + biases + io + inter + (2 << 20)


def _vmem_cap_bytes():
    """0.9 * physical VMEM (generation-aware: 64 MiB v7x, 128 MiB v5e/v6e)."""
    try:
        cap = int(pltpu.get_tpu_info().vmem_capacity_bytes)
        return int(0.9 * cap)
    except Exception:
        return 57 * 1024 * 1024  # conservative: fits v7x's 64 MiB


def _select_batch_tile(B, batch_tile):
    if B <= 32:
        # tiny batch: one grid step, sublane-aligned (bf16 packs 16 rows/vreg)
        return _round_up(B, 16)
    if B <= batch_tile:
        # medium batch: >= 2 grid blocks so v7x's second TensorCore gets work
        return _round_up(-(-B // 2), 16)
    # large batch: MXU-shaped tiles; fewer steps amortize ~0.35us/step overhead
    return batch_tile


def expert_forward(x, prepared, *, batch_tile=512):
    """Expert.forward (non-recursive): returns (mlp(x), zeros(batch))."""
    B, Din = x.shape
    Din_l, H1_l, H2_l, Dout_l = prepared["dims"]
    assert Din == Din_l, (Din, Din_l)
    w1_p, b1_p = prepared["w1"], prepared["b1"]
    w2_p, b2_p = prepared["w2"], prepared["b2"]
    w3_p, b3_p = prepared["w3"], prepared["b3"]
    Din_p, H1_p = w1_p.shape
    H2_p = w2_p.shape[1]
    Dout_p = w3_p.shape[1]
    out_dtype = x.dtype

    tile = _select_batch_tile(B, batch_tile)
    B_p = _round_up(B, tile)

    # Per-call padding touches only x (batch + input lanes); x stays f32 and is
    # cast to bf16 inside the kernel (saves a separate XLA read+write pass).
    x_p = jnp.pad(x, ((0, B_p - B), (0, Din_p - Din))).astype(jnp.float32)

    grid = (B_p // tile,)

    flops = 2 * B_p * (Din_p * H1_p + H1_p * H2_p + H2_p * Dout_p)
    bytes_accessed = (
        B_p * Din_p * 4
        + (Din_p * H1_p + H1_p * H2_p + H2_p * Dout_p) * 2
        + (H1_p + H2_p + Dout_p) * 4
        + B_p * Dout_p * jnp.dtype(out_dtype).itemsize
    )
    cost = pl.CostEstimate(flops=int(flops), transcendentals=0,
                           bytes_accessed=int(bytes_accessed))
    vmem_cap = _vmem_cap_bytes()

    def run(single_buffer_weights):
        weight_bufs = 1 if single_buffer_weights else 2
        est = _vmem_estimate_bytes(tile, Din_p, H1_p, H2_p, Dout_p, weight_bufs)
        vmem_limit = int(min(max(est, 32 * 1024 * 1024), vmem_cap))
        w_kw = {"pipeline_mode": pl.Buffered(1)} if single_buffer_weights else {}
        in_specs = [
            pl.BlockSpec((tile, Din_p), lambda i: (i, 0)),           # x tile
            pl.BlockSpec((Din_p, H1_p), lambda i: (0, 0), **w_kw),   # W1 (resident)
            pl.BlockSpec((1, H1_p), lambda i: (0, 0), **w_kw),       # b1
            pl.BlockSpec((H1_p, H2_p), lambda i: (0, 0), **w_kw),    # W2 (resident)
            pl.BlockSpec((1, H2_p), lambda i: (0, 0), **w_kw),       # b2
            pl.BlockSpec((H2_p, Dout_p), lambda i: (0, 0), **w_kw),  # W3 (resident)
            pl.BlockSpec((1, Dout_p), lambda i: (0, 0), **w_kw),     # b3
        ]
        return pl.pallas_call(
            _expert_mlp_kernel,
            out_shape=jax.ShapeDtypeStruct((B_p, Dout_p), out_dtype),
            grid=grid,
            in_specs=in_specs,
            out_specs=pl.BlockSpec((tile, Dout_p), lambda i: (i, 0)),
            compiler_params=pltpu.CompilerParams(
                dimension_semantics=("parallel",),   # shard batch blocks across TCs
                vmem_limit_bytes=vmem_limit,
            ),
            cost_estimate=cost,
        )(x_p, w1_p, b1_p, w2_p, b2_p, w3_p, b3_p)

    try:
        mlp_out_p = run(True)
    except Exception:
        # Fallback for JAX builds that reject pipeline_mode=pl.Buffered(1).
        mlp_out_p = run(False)

    mlp_out = mlp_out_p[:B, :Dout_l]
    # second return value of Expert.forward: torch.zeros(data.shape[0])
    aux = jnp.zeros((B,), dtype=jnp.float32)
    return mlp_out, aux


# ---------------------------------------------------------------------------
# Test harness
# ---------------------------------------------------------------------------
def init_linear(key, fan_in, fan_out):
    """Deterministic PyTorch-nn.Linear-style init: U(-1/sqrt(fan_in), 1/sqrt(fan_in))."""
    kw, kb = jax.random.split(key)
    bound = 1.0 / jnp.sqrt(jnp.float32(fan_in))
    w = jax.random.uniform(kw, (fan_in, fan_out), jnp.float32, -bound, bound)
    b = jax.random.uniform(kb, (fan_out,), jnp.float32, -bound, bound)
    return w, b


def reference_forward(x, params):
    """Plain-JAX reference with the same bf16-operand / f32-accumulate recipe."""
    (w1, b1), (w2, b2), (w3, b3) = params
    c = _COMPUTE_DTYPE
    h1 = jnp.maximum(jnp.dot(x.astype(c), w1.astype(c),
                             preferred_element_type=jnp.float32) + b1, 0.0)
    h2 = jnp.maximum(jnp.dot(h1.astype(c), w2.astype(c),
                             preferred_element_type=jnp.float32) + b2, 0.0)
    return jnp.dot(h2.astype(c), w3.astype(c),
                   preferred_element_type=jnp.float32) + b3


if __name__ == "__main__":
    # Small shapes consistent with the module: input_size=128,
    # hidden_layers=(256, 256) (scaled down from (2148, 2148)),
    # experts_output_dim=128, batch=16.
    B, Din, H1, H2, Dout = 16, 128, 256, 256, 128

    key = jax.random.PRNGKey(0)
    kx, k1, k2, k3 = jax.random.split(key, 4)
    x = jax.random.normal(kx, (B, Din), dtype=jnp.float32)
    params = (
        init_linear(k1, Din, H1),
        init_linear(k2, H1, H2),
        init_linear(k3, H2, Dout),
    )
    prepared = prepare_expert_params(params)  # pad + cast once (not per call)

    result, total_gat = expert_forward(x, prepared)
    result = jax.block_until_ready(result)
    total_gat = jax.block_until_ready(total_gat)

    ref = reference_forward(x, params)
    assert result.shape == (B, Dout) and result.dtype == x.dtype
    assert total_gat.shape == (B,)
    assert jnp.allclose(result, ref, atol=2e-2, rtol=2e-2), \
        float(jnp.max(jnp.abs(result - ref)))
    assert jnp.all(total_gat == 0.0)

    # Ragged batch + non-lane-aligned feature dims exercise the padding path.
    B2, Din2, H1b, H2b, Dout2 = 10, 96, 200, 144, 72
    kx2, k4, k5, k6 = jax.random.split(jax.random.PRNGKey(1), 4)
    x2 = jax.random.normal(kx2, (B2, Din2), dtype=jnp.float32)
    params2 = (
        init_linear(k4, Din2, H1b),
        init_linear(k5, H1b, H2b),
        init_linear(k6, H2b, Dout2),
    )
    prepared2 = prepare_expert_params(params2)
    result2, aux2 = expert_forward(x2, prepared2)
    result2 = jax.block_until_ready(result2)
    ref2 = reference_forward(x2, params2)
    assert result2.shape == (B2, Dout2)
    assert aux2.shape == (B2,)
    assert jnp.allclose(result2, ref2, atol=2e-2, rtol=2e-2), \
        float(jnp.max(jnp.abs(result2 - ref2)))

    # Medium batch exercises the >=2-block split path (two TC shards on v7x).
    B3 = 100
    x3 = jax.random.normal(jax.random.PRNGKey(2), (B3, Din), dtype=jnp.float32)
    result3, aux3 = expert_forward(x3, prepared)
    result3 = jax.block_until_ready(result3)
    ref3 = reference_forward(x3, params)
    assert result3.shape == (B3, Dout) and aux3.shape == (B3,)
    assert jnp.allclose(result3, ref3, atol=2e-2, rtol=2e-2), \
        float(jnp.max(jnp.abs(result3 - ref3)))

    print("KERNEL_OK")
</pallas_src>

<mosaic_0001>
module attributes {stable_mosaic.version = 11 : i64} {
  func.func @_expert_mlp_kernel(%arg0: i32, %arg1: memref<16x128xf32, #tpu.memory_space<vmem>>, %arg2: memref<128x256xbf16, #tpu.memory_space<vmem>>, %arg3: memref<1x256xf32, #tpu.memory_space<vmem>>, %arg4: memref<256x256xbf16, #tpu.memory_space<vmem>>, %arg5: memref<1x256xf32, #tpu.memory_space<vmem>>, %arg6: memref<256x128xbf16, #tpu.memory_space<vmem>>, %arg7: memref<1x128xf32, #tpu.memory_space<vmem>>, %arg8: memref<16x128xf32, #tpu.memory_space<vmem>>) attributes {dimension_semantics = [#tpu.dimension_semantics<parallel>], iteration_bounds = array<i64: 1>, scalar_prefetch = 0 : i64, scratch_operands = 0 : i64, tpu.core_type = #tpu.core_type<tc>, window_params = [{transform_indices = @transform_0, window_bounds = array<i64: 16, 128>}, {pipeline_mode = #tpu.pipeline_mode<synchronous>, transform_indices = @transform_1, window_bounds = array<i64: 128, 256>}, {pipeline_mode = #tpu.pipeline_mode<synchronous>, transform_indices = @transform_2, window_bounds = array<i64: 1, 256>}, {pipeline_mode = #tpu.pipeline_mode<synchronous>, transform_indices = @transform_3, window_bounds = array<i64: 256, 256>}, {pipeline_mode = #tpu.pipeline_mode<synchronous>, transform_indices = @transform_4, window_bounds = array<i64: 1, 256>}, {pipeline_mode = #tpu.pipeline_mode<synchronous>, transform_indices = @transform_5, window_bounds = array<i64: 256, 128>}, {pipeline_mode = #tpu.pipeline_mode<synchronous>, transform_indices = @transform_6, window_bounds = array<i64: 1, 128>}, {transform_indices = @transform_7, window_bounds = array<i64: 16, 128>}]} {
    %c0 = arith.constant 0 : index
    %c0_0 = arith.constant 0 : index
    %0 = vector.load %arg1[%c0, %c0_0] : memref<16x128xf32, #tpu.memory_space<vmem>>, vector<16x128xf32>
    %1 = arith.truncf %0 : vector<16x128xf32> to vector<16x128xbf16>
    %c0_1 = arith.constant 0 : index
    %c0_2 = arith.constant 0 : index
    %2 = vector.load %arg2[%c0_1, %c0_2] : memref<128x256xbf16, #tpu.memory_space<vmem>>, vector<128x256xbf16>
    %cst = arith.constant dense<0.000000e+00> : vector<16x256xf32>
    %3 = tpu.matmul %1, %2, %cst {dimension_numbers = #tpu.dot_dimension_numbers<[1], [0], [0], [1], [0, 0, 1, 1], [], []>} : vector<16x128xbf16>, vector<128x256xbf16>, vector<16x256xf32> -> vector<16x256xf32>
    %c0_3 = arith.constant 0 : index
    %c0_4 = arith.constant 0 : index
    %4 = vector.load %arg3[%c0_3, %c0_4] : memref<1x256xf32, #tpu.memory_space<vmem>>, vector<1x256xf32>
    %5 = vector.broadcast %4 : vector<1x256xf32> to vector<16x256xf32>
    %6 = arith.addf %3, %5 : vector<16x256xf32>
    %cst_5 = arith.constant 0.000000e+00 : f32
    %7 = vector.broadcast %cst_5 : f32 to vector<16x256xf32>
    %8 = arith.maximumf %6, %7 : vector<16x256xf32>
    %9 = arith.truncf %8 : vector<16x256xf32> to vector<16x256xbf16>
    %c0_6 = arith.constant 0 : index
    %c0_7 = arith.constant 0 : index
    %10 = vector.load %arg4[%c0_6, %c0_7] : memref<256x256xbf16, #tpu.memory_space<vmem>>, vector<256x256xbf16>
    %cst_8 = arith.constant dense<0.000000e+00> : vector<16x256xf32>
    %11 = tpu.matmul %9, %10, %cst_8 {dimension_numbers = #tpu.dot_dimension_numbers<[1], [0], [0], [1], [0, 0, 1, 1], [], []>} : vector<16x256xbf16>, vector<256x256xbf16>, vector<16x256xf32> -> vector<16x256xf32>
    %c0_9 = arith.constant 0 : index
    %c0_10 = arith.constant 0 : index
    %12 = vector.load %arg5[%c0_9, %c0_10] : memref<1x256xf32, #tpu.memory_space<vmem>>, vector<1x256xf32>
    %13 = vector.broadcast %12 : vector<1x256xf32> to vector<16x256xf32>
    %14 = arith.addf %11, %13 : vector<16x256xf32>
    %cst_11 = arith.constant 0.000000e+00 : f32
    %15 = vector.broadcast %cst_11 : f32 to vector<16x256xf32>
    %16 = arith.maximumf %14, %15 : vector<16x256xf32>
    %17 = arith.truncf %16 : vector<16x256xf32> to vector<16x256xbf16>
    %c0_12 = arith.constant 0 : index
    %c0_13 = arith.constant 0 : index
    %18 = vector.load %arg6[%c0_12, %c0_13] : memref<256x128xbf16, #tpu.memory_space<vmem>>, vector<256x128xbf16>
    %cst_14 = arith.constant dense<0.000000e+00> : vector<16x128xf32>
    %19 = tpu.matmul %17, %18, %cst_14 {dimension_numbers = #tpu.dot_dimension_numbers<[1], [0], [0], [1], [0, 0, 1, 1], [], []>} : vector<16x256xbf16>, vector<256x128xbf16>, vector<16x128xf32> -> vector<16x128xf32>
    %c0_15 = arith.constant 0 : index
    %c0_16 = arith.constant 0 : index
    %20 = vector.load %arg7[%c0_15, %c0_16] : memref<1x128xf32, #tpu.memory_space<vmem>>, vector<1x128xf32>
    %21 = vector.broadcast %20 : vector<1x128xf32> to vector<16x128xf32>
    %22 = arith.addf %19, %21 : vector<16x128xf32>
    %c0_17 = arith.constant 0 : index
    %c0_18 = arith.constant 0 : index
    %23 = vector.load %arg8[%c0_17, %c0_18] : memref<16x128xf32, #tpu.memory_space<vmem>>, vector<16x128xf32>
    tpu.vector_store %arg8[%c0_17, %c0_18], %22 {strides = array<i32>} : memref<16x128xf32, #tpu.memory_space<vmem>>, vector<16x128xf32>,
    return
  }
  func.func @transform_0(%arg0: i32) -> (i32, i32) {
    %c0_i32 = arith.constant 0 : i32
    %c0_i32_0 = arith.constant 0 : i32
    return %arg0, %c0_i32 : i32, i32
  }
  func.func @transform_1(%arg0: i32) -> (i32, i32) {
    %c0_i32 = arith.constant 0 : i32
    %c0_i32_0 = arith.constant 0 : i32
    %c0_i32_1 = arith.constant 0 : i32
    return %c0_i32, %c0_i32_0 : i32, i32
  }
  func.func @transform_2(%arg0: i32) -> (i32, i32) {
    %c0_i32 = arith.constant 0 : i32
    %c0_i32_0 = arith.constant 0 : i32
    %c0_i32_1 = arith.constant 0 : i32
    return %c0_i32, %c0_i32_0 : i32, i32
  }
  func.func @transform_3(%arg0: i32) -> (i32, i32) {
    %c0_i32 = arith.constant 0 : i32
    %c0_i32_0 = arith.constant 0 : i32
    %c0_i32_1 = arith.constant 0 : i32
    return %c0_i32, %c0_i32_0 : i32, i32
  }
  func.func @transform_4(%arg0: i32) -> (i32, i32) {
    %c0_i32 = arith.constant 0 : i32
    %c0_i32_0 = arith.constant 0 : i32
    %c0_i32_1 = arith.constant 0 : i32
    return %c0_i32, %c0_i32_0 : i32, i32
  }
  func.func @transform_5(%arg0: i32) -> (i32, i32) {
    %c0_i32 = arith.constant 0 : i32
    %c0_i32_0 = arith.constant 0 : i32
    %c0_i32_1 = arith.constant 0 : i32
    return %c0_i32, %c0_i32_0 : i32, i32
  }
  func.func @transform_6(%arg0: i32) -> (i32, i32) {
    %c0_i32 = arith.constant 0 : i32
    %c0_i32_0 = arith.constant 0 : i32
    %c0_i32_1 = arith.constant 0 : i32
    return %c0_i32, %c0_i32_0 : i32, i32
  }
  func.func @transform_7(%arg0: i32) -> (i32, i32) {
    %c0_i32 = arith.constant 0 : i32
    %c0_i32_0 = arith.constant 0 : i32
    return %arg0, %c0_i32 : i32, i32
  }
}

module attributes {stable_mosaic.version = 11 : i64} {
  func.func @_expert_mlp_kernel(%arg0: i32, %arg1: memref<16x128xf32, #tpu.memory_space<vmem>>, %arg2: memref<128x256xbf16, #tpu.memory_space<vmem>>, %arg3: memref<1x256xf32, #tpu.memory_space<vmem>>, %arg4: memref<256x256xbf16, #tpu.memory_space<vmem>>, %arg5: memref<1x256xf32, #tpu.memory_space<vmem>>, %arg6: memref<256x128xbf16, #tpu.memory_space<vmem>>, %arg7: memref<1x128xf32, #tpu.memory_space<vmem>>, %arg8: memref<16x128xf32, #tpu.memory_space<vmem>>) attributes {dimension_semantics = [#tpu.dimension_semantics<parallel>], iteration_bounds = array<i64: 1>, scalar_prefetch = 0 : i64, scratch_operands = 0 : i64, tpu.core_type = #tpu.core_type<tc>, window_params = [{transform_indices = @transform_0, window_bounds = array<i64: 16, 128>}, {pipeline_mode = #tpu.pipeline_mode<synchronous>, transform_indices = @transform_1, window_bounds = array<i64: 128, 256>}, {pipeline_mode = #tpu.pipeline_mode<synchronous>, transform_indices = @transform_2, window_bounds = array<i64: 1, 256>}, {pipeline_mode = #tpu.pipeline_mode<synchronous>, transform_indices = @transform_3, window_bounds = array<i64: 256, 256>}, {pipeline_mode = #tpu.pipeline_mode<synchronous>, transform_indices = @transform_4, window_bounds = array<i64: 1, 256>}, {pipeline_mode = #tpu.pipeline_mode<synchronous>, transform_indices = @transform_5, window_bounds = array<i64: 256, 128>}, {pipeline_mode = #tpu.pipeline_mode<synchronous>, transform_indices = @transform_6, window_bounds = array<i64: 1, 128>}, {transform_indices = @transform_7, window_bounds = array<i64: 16, 128>}]} {
    %c0 = arith.constant 0 : index
    %c0_0 = arith.constant 0 : index
    %0 = vector.load %arg1[%c0, %c0_0] : memref<16x128xf32, #tpu.memory_space<vmem>>, vector<16x128xf32>
    %1 = arith.truncf %0 : vector<16x128xf32> to vector<16x128xbf16>
    %c0_1 = arith.constant 0 : index
    %c0_2 = arith.constant 0 : index
    %2 = vector.load %arg2[%c0_1, %c0_2] : memref<128x256xbf16, #tpu.memory_space<vmem>>, vector<128x256xbf16>
    %cst = arith.constant dense<0.000000e+00> : vector<16x256xf32>
    %3 = tpu.matmul %1, %2, %cst {dimension_numbers = #tpu.dot_dimension_numbers<[1], [0], [0], [1], [0, 0, 1, 1], [], []>} : vector<16x128xbf16>, vector<128x256xbf16>, vector<16x256xf32> -> vector<16x256xf32>
    %c0_3 = arith.constant 0 : index
    %c0_4 = arith.constant 0 : index
    %4 = vector.load %arg3[%c0_3, %c0_4] : memref<1x256xf32, #tpu.memory_space<vmem>>, vector<1x256xf32>
    %5 = vector.broadcast %4 : vector<1x256xf32> to vector<16x256xf32>
    %6 = arith.addf %3, %5 : vector<16x256xf32>
    %cst_5 = arith.constant 0.000000e+00 : f32
    %7 = vector.broadcast %cst_5 : f32 to vector<16x256xf32>
    %8 = arith.maximumf %6, %7 : vector<16x256xf32>
    %9 = arith.truncf %8 : vector<16x256xf32> to vector<16x256xbf16>
    %c0_6 = arith.constant 0 : index
    %c0_7 = arith.constant 0 : index
    %10 = vector.load %arg4[%c0_6, %c0_7] : memref<256x256xbf16, #tpu.memory_space<vmem>>, vector<256x256xbf16>
    %cst_8 = arith.constant dense<0.000000e+00> : vector<16x256xf32>
    %11 = tpu.matmul %9, %10, %cst_8 {dimension_numbers = #tpu.dot_dimension_numbers<[1], [0], [0], [1], [0, 0, 1, 1], [], []>} : vector<16x256xbf16>, vector<256x256xbf16>, vector<16x256xf32> -> vector<16x256xf32>
    %c0_9 = arith.constant 0 : index
    %c0_10 = arith.constant 0 : index
    %12 = vector.load %arg5[%c0_9, %c0_10] : memref<1x256xf32, #tpu.memory_space<vmem>>, vector<1x256xf32>
    %13 = vector.broadcast %12 : vector<1x256xf32> to vector<16x256xf32>
    %14 = arith.addf %11, %13 : vector<16x256xf32>
    %cst_11 = arith.constant 0.000000e+00 : f32
    %15 = vector.broadcast %cst_11 : f32 to vector<16x256xf32>
    %16 = arith.maximumf %14, %15 : vector<16x256xf32>
    %17 = arith.truncf %16 : vector<16x256xf32> to vector<16x256xbf16>
    %c0_12 = arith.constant 0 : index
    %c0_13 = arith.constant 0 : index
    %18 = vector.load %arg6[%c0_12, %c0_13] : memref<256x128xbf16, #tpu.memory_space<vmem>>, vector<256x128xbf16>
    %cst_14 = arith.constant dense<0.000000e+00> : vector<16x128xf32>
    %19 = tpu.matmul %17, %18, %cst_14 {dimension_numbers = #tpu.dot_dimension_numbers<[1], [0], [0], [1], [0, 0, 1, 1], [], []>} : vector<16x256xbf16>, vector<256x128xbf16>, vector<16x128xf32> -> vector<16x128xf32>
    %c0_15 = arith.constant 0 : index
    %c0_16 = arith.constant 0 : index
    %20 = vector.load %arg7[%c0_15, %c0_16] : memref<1x128xf32, #tpu.memory_space<vmem>>, vector<1x128xf32>
    %21 = vector.broadcast %20 : vector<1x128xf32> to vector<16x128xf32>
    %22 = arith.addf %19, %21 : vector<16x128xf32>
    %c0_17 = arith.constant 0 : index
    %c0_18 = arith.constant 0 : index
    %23 = vector.load %arg8[%c0_17, %c0_18] : memref<16x128xf32, #tpu.memory_space<vmem>>, vector<16x128xf32>
    tpu.vector_store %arg8[%c0_17, %c0_18], %22 {strides = array<i32>} : memref<16x128xf32, #tpu.memory_space<vmem>>, vector<16x128xf32>,
    return
  }
  func.func @transform_0(%arg0: i32) -> (i32, i32) {
    %c0_i32 = arith.constant 0 : i32
    %c0_i32_0 = arith.constant 0 : i32
    return %arg0, %c0_i32 : i32, i32
  }
  func.func @transform_1(%arg0: i32) -> (i32, i32) {
    %c0_i32 = arith.constant 0 : i32
    %c0_i32_0 = arith.constant 0 : i32
    %c0_i32_1 = arith.constant 0 : i32
    return %c0_i32, %c0_i32_0 : i32, i32
  }
  func.func @transform_2(%arg0: i32) -> (i32, i32) {
    %c0_i32 = arith.constant 0 : i32
    %c0_i32_0 = arith.constant 0 : i32
    %c0_i32_1 = arith.constant 0 : i32
    return %c0_i32, %c0_i32_0 : i32, i32
  }
  func.func @transform_3(%arg0: i32) -> (i32, i32) {
    %c0_i32 = arith.constant 0 : i32
    %c0_i32_0 = arith.constant 0 : i32
    %c0_i32_1 = arith.constant 0 : i32
    return %c0_i32, %c0_i32_0 : i32, i32
  }
  func.func @transform_4(%arg0: i32) -> (i32, i32) {
    %c0_i32 = arith.constant 0 : i32
    %c0_i32_0 = arith.constant 0 : i32
    %c0_i32_1 = arith.constant 0 : i32
    return %c0_i32, %c0_i32_0 : i32, i32
  }
  func.func @transform_5(%arg0: i32) -> (i32, i32) {
    %c0_i32 = arith.constant 0 : i32
    %c0_i32_0 = arith.constant 0 : i32
    %c0_i32_1 = arith.constant 0 : i32
    return %c0_i32, %c0_i32_0 : i32, i32
  }
  func.func @transform_6(%arg0: i32) -> (i32, i32) {
    %c0_i32 = arith.constant 0 : i32
    %c0_i32_0 = arith.constant 0 : i32
    %c0_i32_1 = arith.constant 0 : i32
    return %c0_i32, %c0_i32_0 : i32, i32
  }
  func.func @transform_7(%arg0: i32) -> (i32, i32) {
    %c0_i32 = arith.constant 0 : i32
    %c0_i32_0 = arith.constant 0 : i32
    return %arg0, %c0_i32 : i32, i32
  }
}

</mosaic_0001>

<llo_original>
// kernel: tpu_custom_call.1
$region0: #{tpu_custom_call.1}
  #allocation0 [shape = 'u32[]', space=smem, size = 0x4, offset = 0x4, fixed_abs, tag = 'smem constant byte address 0x4 - core index']
  #allocation1 [shape = 'u32[144,128]{1,0:T(1,128)}', space=vmem, size = 0x12000, scoped, tag = 'internal scratch']
  %s0 = inlined_call_operand.hbm [shape: f32[16,128], index: 0, kind: input, shape index: {}]
  %s1 = inlined_call_operand.hbm [shape: bf16[128,256], index: 1, kind: input, shape index: {}]
  %s2 = inlined_call_operand.vmem [shape: f32[1,256], index: 2, kind: input, shape index: {}]
  %s3 = inlined_call_operand.hbm [shape: bf16[256,256], index: 3, kind: input, shape index: {}]
  %s4 = inlined_call_operand.vmem [shape: f32[1,256], index: 4, kind: input, shape index: {}]
  %s5 = inlined_call_operand.hbm [shape: bf16[256,128], index: 5, kind: input, shape index: {}]
  %s6 = inlined_call_operand.vmem [shape: f32[1,128], index: 6, kind: input, shape index: {}]
  %s7 = inlined_call_operand.hbm [shape: f32[16,128], index: 7, kind: output, shape index: {}]
  %s8 = sld [smem:[#allocation0]]
  $region54: #{tpu_custom_call.1} parent=0
    _
  %s10 = ssub.s32 1, %s8
  %s11 = scalar_select 0, %s10, %s8
  $region1: #{tpu_custom_call.1} parent=0
    #allocation2 [shape = 'u8[8192]{0}', space=vmem, size = 0x2000, scoped, tag = 'input window, operand 0, single buffered']
    #allocation3 [shape = 's32[1]{0}', space=sflag, size = 0x4, scoped, tag = 'scoped memory for tpu_custom_call.1']
    #allocation4 [shape = 's32[1]{0}', space=sflag, size = 0x4, scoped, tag = 'scoped memory for tpu_custom_call.1']
    #allocation5 [shape = 'u8[65536]{0}', space=vmem, size = 0x10000, scoped, tag = 'input window, operand 1, single buffered']
    #allocation6 [shape = 's32[1]{0}', space=sflag, size = 0x4, scoped, tag = 'scoped memory for tpu_custom_call.1']
    #allocation7 [shape = 'u8[131072]{0}', space=vmem, size = 0x20000, scoped, tag = 'input window, operand 3, single buffered']
    #allocation8 [shape = 'u8[65536]{0}', space=vmem, size = 0x10000, scoped, tag = 'input window, operand 5, single buffered']
    #allocation9 [shape = 's32[1]{0}', space=sflag, size = 0x4, scoped, tag = 'scoped memory for tpu_custom_call.1']
    #allocation10 [shape = 'u8[8192]{0}', space=vmem, size = 0x2000, scoped, tag = 'output window, operand 0, single buffered']
    %12 = vsyncpa [#allocation3], 0
    %13 = vsyncpa [#allocation6], 0
    %14 = vsyncpa [#allocation9], 0
    %15 = vsyncpa [#allocation4], 0
    // Predicated region
    $region2: #{tpu_custom_call.1} parent=1 // pred_check
      _
    $region3: #{tpu_custom_call.1} parent=1 // pred_check_branch
      %17 = sbr.rel (0) target = $region5
    $region4: #{tpu_custom_call.1} parent=1 // pred_region
      %s19 = ssub.s32 256, 256
      %20 = vsyncadd [#allocation3], %s19
      %s21 = sshll.u32 [#allocation2], 4
      %s22 = int_to_ptr.vmem [resolvable:$true] %s21
      %27 = dma.hbm_to_vmem [thread:$0]  %s0, 256, %s22, [#allocation3], 128, 128, 8
    $region5: #{tpu_custom_call.1} parent=1 // pred_fallthru
      _
    // Predicated region
    $region6: #{tpu_custom_call.1} parent=1 // pred_check
      _
    $region7: #{tpu_custom_call.1} parent=1 // pred_check_branch
      %29 = sbr.rel (0) target = $region9
    $region8: #{tpu_custom_call.1} parent=1 // pred_region
      %s31 = ssub.s32 2048, 2048
      %32 = vsyncadd [#allocation6], %s31
      %s33 = sshll.u32 [#allocation5], 4
      %s34 = int_to_ptr.vmem [resolvable:$true] %s33
      %39 = dma.hbm_to_vmem [thread:$0]  %s1, 2048, %s34, [#allocation6], 128, 128, 8
    $region9: #{tpu_custom_call.1} parent=1 // pred_fallthru
      _
    // Predicated region
    $region10: #{tpu_custom_call.1} parent=1 // pred_check
      _
    $region11: #{tpu_custom_call.1} parent=1 // pred_check_branch
      %41 = sbr.rel (0) target = $region13
    $region12: #{tpu_custom_call.1} parent=1 // pred_region
      _
    $region13: #{tpu_custom_call.1} parent=1 // pred_fallthru
      _
    // Predicated region
    $region14: #{tpu_custom_call.1} parent=1 // pred_check
      _
    $region15: #{tpu_custom_call.1} parent=1 // pred_check_branch
      %43 = sbr.rel (0) target = $region17
    $region16: #{tpu_custom_call.1} parent=1 // pred_region
      %s45 = ssub.s32 4096, 4096
      %46 = vsyncadd [#allocation6], %s45
      %s47 = sshll.u32 [#allocation7], 4
      %s48 = int_to_ptr.vmem [resolvable:$true] %s47
      %53 = dma.hbm_to_vmem [thread:$0]  %s3, 4096, %s48, [#allocation6], 128, 128, 8
    $region17: #{tpu_custom_call.1} parent=1 // pred_fallthru
      _
    // Predicated region
    $region18: #{tpu_custom_call.1} parent=1 // pred_check
      _
    $region19: #{tpu_custom_call.1} parent=1 // pred_check_branch
      %55 = sbr.rel (0) target = $region21
    $region20: #{tpu_custom_call.1} parent=1 // pred_region
      _
    $region21: #{tpu_custom_call.1} parent=1 // pred_fallthru
      _
    // Predicated region
    $region22: #{tpu_custom_call.1} parent=1 // pred_check
      _
    $region23: #{tpu_custom_call.1} parent=1 // pred_check_branch
      %57 = sbr.rel (0) target = $region25
    $region24: #{tpu_custom_call.1} parent=1 // pred_region
      %s59 = ssub.s32 2048, 2048
      %60 = vsyncadd [#allocation9], %s59
      %s61 = sshll.u32 [#allocation8], 4
      %s62 = int_to_ptr.vmem [resolvable:$true] %s61
      %67 = dma.hbm_to_vmem [thread:$0]  %s5, 2048, %s62, [#allocation9], 64, 64, 4
    $region25: #{tpu_custom_call.1} parent=1 // pred_fallthru
      _
    // Predicated region
    $region26: #{tpu_custom_call.1} parent=1 // pred_check
      _
    $region27: #{tpu_custom_call.1} parent=1 // pred_check_branch
      %69 = sbr.rel (0) target = $region29
    $region28: #{tpu_custom_call.1} parent=1 // pred_region
      _
    $region29: #{tpu_custom_call.1} parent=1 // pred_fallthru
      _
    // Predicated region
    $region30: #{tpu_custom_call.1} parent=1 // pred_check
      _
    $region31: #{tpu_custom_call.1} parent=1 // pred_check_branch
      %71 = sbr.rel (0) target = $region33
    $region32: #{tpu_custom_call.1} parent=1 // pred_region
      %72 = dma.done [#allocation3], 256
    $region33: #{tpu_custom_call.1} parent=1 // pred_fallthru
      _
    // Predicated region
    $region34: #{tpu_custom_call.1} parent=1 // pred_check
      _
    $region35: #{tpu_custom_call.1} parent=1 // pred_check_branch
      %74 = sbr.rel (0) target = $region37
    $region36: #{tpu_custom_call.1} parent=1 // pred_region
      %75 = dma.done [#allocation6], 2048
    $region37: #{tpu_custom_call.1} parent=1 // pred_fallthru
      _
    // Predicated region
    $region38: #{tpu_custom_call.1} parent=1 // pred_check
      _
    $region39: #{tpu_custom_call.1} parent=1 // pred_check_branch
      %77 = sbr.rel (0) target = $region41
    $region40: #{tpu_custom_call.1} parent=1 // pred_region
      %78 = dma.done [#allocation6], 4096
    $region41: #{tpu_custom_call.1} parent=1 // pred_fallthru
      _
    // Predicated region
    $region42: #{tpu_custom_call.1} parent=1 // pred_check
      _
    $region43: #{tpu_custom_call.1} parent=1 // pred_check_branch
      %80 = sbr.rel (0) target = $region45
    $region44: #{tpu_custom_call.1} parent=1 // pred_region
      %81 = dma.done [#allocation9], 2048
    $region45: #{tpu_custom_call.1} parent=1 // pred_fallthru
      _
    %v83 = vld [vmem:[#allocation2] sm:$0xff]
    %v84 = vld [vmem:[#allocation2 + $0x8] sm:$0xff]
    %v85 = vpack.c.bf16 %v84, %v83
    %v86 = vld [vmem:[#allocation5] sm:$0xff]
    %v87 = vld [vmem:[#allocation5 + $0x8] sm:$0xff]
    %v88 = vld [vmem:[#allocation5 + $0x10] sm:$0xff]
    %v89 = vld [vmem:[#allocation5 + $0x18] sm:$0xff]
    %v90 = vld [vmem:[#allocation5 + $0x20] sm:$0xff]
    %v91 = vld [vmem:[#allocation5 + $0x28] sm:$0xff]
    %v92 = vld [vmem:[#allocation5 + $0x30] sm:$0xff]
    %v93 = vld [vmem:[#allocation5 + $0x38] sm:$0xff]
    %v94 = vld [vmem:[#allocation5 + $0x40] sm:$0xff]
    %v95 = vld [vmem:[#allocation5 + $0x48] sm:$0xff]
    %v96 = vld [vmem:[#allocation5 + $0x50] sm:$0xff]
    %v97 = vld [vmem:[#allocation5 + $0x58] sm:$0xff]
    %v98 = vld [vmem:[#allocation5 + $0x60] sm:$0xff]
    %v99 = vld [vmem:[#allocation5 + $0x68] sm:$0xff]
    %v100 = vld [vmem:[#allocation5 + $0x70] sm:$0xff]
    %v101 = vld [vmem:[#allocation5 + $0x78] sm:$0xff]
    %v102 = vld [vmem:[%s2] sm:$0x3]
    %v104 = vlaneseq
    %v105 = vshrl.u32 %v104, 7
    %v106 = vsub.s32 0, %v105
    %v107 = vrot.slane %v102, %v106
    %v108 = vlaneseq
    %v109 = vshrl.u32 %v108, 7
    %v110 = vsub.s32 1, %v109
    %v111 = vrot.slane %v102, %v110
    %v130 = vunpack.c.l.b16 %v86
    %v131 = vunpack.c.h.b16 %v86
    %v132 = vunpack.c.l.b16 %v87
    %v133 = vunpack.c.h.b16 %v87
    %v134 = vunpack.c.l.b16 %v88
    %v135 = vunpack.c.h.b16 %v88
    %v136 = vunpack.c.l.b16 %v89
    %v137 = vunpack.c.h.b16 %v89
    %v138 = vunpack.c.l.b16 %v90
    %v139 = vunpack.c.h.b16 %v90
    %v140 = vunpack.c.l.b16 %v91
    %v141 = vunpack.c.h.b16 %v91
    %v142 = vunpack.c.l.b16 %v92
    %v143 = vunpack.c.h.b16 %v92
    %v144 = vunpack.c.l.b16 %v93
    %v145 = vunpack.c.h.b16 %v93
    %v146 = vunpack.c.l.b16 %v94
    %v147 = vunpack.c.h.b16 %v94
    %v148 = vunpack.c.l.b16 %v95
    %v149 = vunpack.c.h.b16 %v95
    %v150 = vunpack.c.l.b16 %v96
    %v151 = vunpack.c.h.b16 %v96
    %v152 = vunpack.c.l.b16 %v97
    %v153 = vunpack.c.h.b16 %v97
    %v154 = vunpack.c.l.b16 %v98
    %v155 = vunpack.c.h.b16 %v98
    %v156 = vunpack.c.l.b16 %v99
    %v157 = vunpack.c.h.b16 %v99
    %v158 = vunpack.c.l.b16 %v100
    %v159 = vunpack.c.h.b16 %v100
    %v160 = vunpack.c.l.b16 %v101
    %v161 = vunpack.c.h.b16 %v101
    %v162 = vpack.c.b16 %v132, %v130
    %v163 = vpack.c.b16 %v133, %v131
    %v164 = vpack.c.b16 %v136, %v134
    %v165 = vpack.c.b16 %v137, %v135
    %v166 = vpack.c.b16 %v140, %v138
    %v167 = vpack.c.b16 %v141, %v139
    %v168 = vpack.c.b16 %v144, %v142
    %v169 = vpack.c.b16 %v145, %v143
    %v170 = vpack.c.b16 %v148, %v146
    %v171 = vpack.c.b16 %v149, %v147
    %v172 = vpack.c.b16 %v152, %v150
    %v173 = vpack.c.b16 %v153, %v151
    %v174 = vpack.c.b16 %v156, %v154
    %v175 = vpack.c.b16 %v157, %v155
    %v176 = vpack.c.b16 %v160, %v158
    %v177 = vpack.c.b16 %v161, %v159
    %194 = vmatprep.subr.bf16.mxu0 %v163
    %195 = vmatpush1.bf16.msra.mxu0 %v162
    %196 = vmatprep.subr.bf16.mxu0 %v165
    %197 = vmatpush1.bf16.msra.mxu0 %v164
    %198 = vmatprep.subr.bf16.mxu0 %v167
    %199 = vmatpush1.bf16.msra.mxu0 %v166
    %200 = vmatprep.subr.bf16.mxu0 %v169
    %201 = vmatpush1.bf16.msra.mxu0 %v168
    %202 = vmatprep.subr.bf16.mxu0 %v171
    %203 = vmatpush1.bf16.msra.mxu0 %v170
    %204 = vmatprep.subr.bf16.mxu0 %v173
    %205 = vmatpush1.bf16.msra.mxu0 %v172
    %206 = vmatprep.subr.bf16.mxu0 %v175
    %207 = vmatpush1.bf16.msra.mxu0 %v174
    %208 = vmatprep.subr.bf16.mxu0 %v177
    %209 = vmatpush1.bf16.msra.mxu0 %v176
    %210 = vmatprep.subr.bf16.mxu0 0
    %211 = vmatpush1.bf16.msra.mxu0 0
    %212 = vmatprep.subr.bf16.mxu0 0
    %213 = vmatpush1.bf16.msra.mxu0 0
    %214 = vmatprep.subr.bf16.mxu0 0
    %215 = vmatpush1.bf16.msra.mxu0 0
    %216 = vmatprep.subr.bf16.mxu0 0
    %217 = vmatpush1.bf16.msra.mxu0 0
    %218 = vmatprep.subr.bf16.mxu0 0
    %219 = vmatpush1.bf16.msra.mxu0 0
    %220 = vmatprep.subr.bf16.mxu0 0
    %221 = vmatpush1.bf16.msra.mxu0 0
    %222 = vmatprep.subr.bf16.mxu0 0
    %223 = vmatpush1.bf16.msra.mxu0 0
    %224 = vmatprep.subr.bf16.mxu0 0
    %225 = vmatpush1.bf16.msra.mxu0 0
    %226 = vmatprep.mubr.bf16.mxu0 0
    %227 = vmatmul.mubr.bf16.gmra.mrb[0].mxu0 %v85
    %v228 = vpop.f32.mrb[0].mxu0
    %v229 = vadd.f32 %v107, %v228
    %v230 = vpop.f32.mrb[0].mxu0
    %v231 = vadd.f32 %v111, %v230
    %v232 = vpop.f32.mrb[0].mxu0
    %v233 = vadd.f32 %v107, %v232
    %v234 = vpop.f32.mrb[0].mxu0
    %v235 = vadd.f32 %v111, %v234
    %236 = vdwg.mxu0
    %v237 = vmax.f32 %v229, 0.0
    %v238 = vmax.f32 %v231, 0.0
    %v239 = vmax.f32 %v233, 0.0
    %v240 = vmax.f32 %v235, 0.0
    %v241 = vpack.c.bf16 %v239, %v237
    %v242 = vpack.c.bf16 %v240, %v238
    %v243 = vld [vmem:[#allocation7] sm:$0xff]
    %v244 = vld [vmem:[#allocation7 + $0x8] sm:$0xff]
    %v245 = vld [vmem:[#allocation7 + $0x10] sm:$0xff]
    %v246 = vld [vmem:[#allocation7 + $0x18] sm:$0xff]
    %v247 = vld [vmem:[#allocation7 + $0x20] sm:$0xff]
    %v248 = vld [vmem:[#allocation7 + $0x28] sm:$0xff]
    %v249 = vld [vmem:[#allocation7 + $0x30] sm:$0xff]
    %v250 = vld [vmem:[#allocation7 + $0x38] sm:$0xff]
    %v251 = vld [vmem:[#allocation7 + $0x40] sm:$0xff]
    %v252 = vld [vmem:[#allocation7 + $0x48] sm:$0xff]
    %v253 = vld [vmem:[#allocation7 + $0x50] sm:$0xff]
    %v254 = vld [vmem:[#allocation7 + $0x58] sm:$0xff]
    %v255 = vld [vmem:[#allocation7 + $0x60] sm:$0xff]
    %v256 = vld [vmem:[#allocation7 + $0x68] sm:$0xff]
    %v257 = vld [vmem:[#allocation7 + $0x70] sm:$0xff]
    %v258 = vld [vmem:[#allocation7 + $0x78] sm:$0xff]
    %v259 = vld [vmem:[#allocation7 + $0x80] sm:$0xff]
    %v260 = vld [vmem:[#allocation7 + $0x88] sm:$0xff]
    %v261 = vld [vmem:[#allocation7 + $0x90] sm:$0xff]
    %v262 = vld [vmem:[#allocation7 + $0x98] sm:$0xff]
    %v263 = vld [vmem:[#allocation7 + $0xa0] sm:$0xff]
    %v264 = vld [vmem:[#allocation7 + $0xa8] sm:$0xff]
    %v265 = vld [vmem:[#allocation7 + $0xb0] sm:$0xff]
    %v266 = vld [vmem:[#allocation7 + $0xb8] sm:$0xff]
    %v267 = vld [vmem:[#allocation7 + $0xc0] sm:$0xff]
    %v268 = vld [vmem:[#allocation7 + $0xc8] sm:$0xff]
    %v269 = vld [vmem:[#allocation7 + $0xd0] sm:$0xff]
    %v270 = vld [vmem:[#allocation7 + $0xd8] sm:$0xff]
    %v271 = vld [vmem:[#allocation7 + $0xe0] sm:$0xff]
    %v272 = vld [vmem:[#allocation7 + $0xe8] sm:$0xff]
    %v273 = vld [vmem:[#allocation7 + $0xf0] sm:$0xff]
    %v274 = vld [vmem:[#allocation7 + $0xf8] sm:$0xff]
    %v275 = vld [vmem:[%s4] sm:$0x3]
    %v277 = vlaneseq
    %v278 = vshrl.u32 %v277, 7
    %v279 = vsub.s32 0, %v278
    %v280 = vrot.slane %v275, %v279
    %v281 = vlaneseq
    %v282 = vshrl.u32 %v281, 7
    %v283 = vsub.s32 1, %v282
    %v284 = vrot.slane %v275, %v283
    %v319 = vunpack.c.l.b16 %v243
    %v320 = vunpack.c.h.b16 %v243
    %v321 = vunpack.c.l.b16 %v244
    %v322 = vunpack.c.h.b16 %v244
    %v323 = vunpack.c.l.b16 %v245
    %v324 = vunpack.c.h.b16 %v245
    %v325 = vunpack.c.l.b16 %v246
    %v326 = vunpack.c.h.b16 %v246
    %v327 = vunpack.c.l.b16 %v247
    %v328 = vunpack.c.h.b16 %v247
    %v329 = vunpack.c.l.b16 %v248
    %v330 = vunpack.c.h.b16 %v248
    %v331 = vunpack.c.l.b16 %v249
    %v332 = vunpack.c.h.b16 %v249
    %v333 = vunpack.c.l.b16 %v250
    %v334 = vunpack.c.h.b16 %v250
    %v335 = vunpack.c.l.b16 %v251
    %v336 = vunpack.c.h.b16 %v251
    %v337 = vunpack.c.l.b16 %v252
    %v338 = vunpack.c.h.b16 %v252
    %v339 = vunpack.c.l.b16 %v253
    %v340 = vunpack.c.h.b16 %v253
    %v341 = vunpack.c.l.b16 %v254
    %v342 = vunpack.c.h.b16 %v254
    %v343 = vunpack.c.l.b16 %v255
    %v344 = vunpack.c.h.b16 %v255
    %v345 = vunpack.c.l.b16 %v256
    %v346 = vunpack.c.h.b16 %v256
    %v347 = vunpack.c.l.b16 %v257
    %v348 = vunpack.c.h.b16 %v257
    %v349 = vunpack.c.l.b16 %v258
    %v350 = vunpack.c.h.b16 %v258
    %v351 = vunpack.c.l.b16 %v259
    %v352 = vunpack.c.h.b16 %v259
    %v353 = vunpack.c.l.b16 %v260
    %v354 = vunpack.c.h.b16 %v260
    %v355 = vunpack.c.l.b16 %v261
    %v356 = vunpack.c.h.b16 %v261
    %v357 = vunpack.c.l.b16 %v262
    %v358 = vunpack.c.h.b16 %v262
    %v359 = vunpack.c.l.b16 %v263
    %v360 = vunpack.c.h.b16 %v263
    %v361 = vunpack.c.l.b16 %v264
    %v362 = vunpack.c.h.b16 %v264
    %v363 = vunpack.c.l.b16 %v265
    %v364 = vunpack.c.h.b16 %v265
    %v365 = vunpack.c.l.b16 %v266
    %v366 = vunpack.c.h.b16 %v266
    %v367 = vunpack.c.l.b16 %v267
    %v368 = vunpack.c.h.b16 %v267
    %v369 = vunpack.c.l.b16 %v268
    %v370 = vunpack.c.h.b16 %v268
    %v371 = vunpack.c.l.b16 %v269
    %v372 = vunpack.c.h.b16 %v269
    %v373 = vunpack.c.l.b16 %v270
    %v374 = vunpack.c.h.b16 %v270
    %v375 = vunpack.c.l.b16 %v271
    %v376 = vunpack.c.h.b16 %v271
    %v377 = vunpack.c.l.b16 %v272
    %v378 = vunpack.c.h.b16 %v272
    %v379 = vunpack.c.l.b16 %v273
    %v380 = vunpack.c.h.b16 %v273
    %v381 = vunpack.c.l.b16 %v274
    %v382 = vunpack.c.h.b16 %v274
    %v383 = vpack.c.b16 %v321, %v319
    %v384 = vpack.c.b16 %v322, %v320
    %v385 = vpack.c.b16 %v325, %v323
    %v386 = vpack.c.b16 %v326, %v324
    %v387 = vpack.c.b16 %v329, %v327
    %v388 = vpack.c.b16 %v330, %v328
    %v389 = vpack.c.b16 %v333, %v331
    %v390 = vpack.c.b16 %v334, %v332
    %v391 = vpack.c.b16 %v337, %v335
    %v392 = vpack.c.b16 %v338, %v336
    %v393 = vpack.c.b16 %v341, %v339
    %v394 = vpack.c.b16 %v342, %v340
    %v395 = vpack.c.b16 %v345, %v343
    %v396 = vpack.c.b16 %v346, %v344
    %v397 = vpack.c.b16 %v349, %v347
    %v398 = vpack.c.b16 %v350, %v348
    %v399 = vpack.c.b16 %v353, %v351
    %v400 = vpack.c.b16 %v354, %v352
    %v401 = vpack.c.b16 %v357, %v355
    %v402 = vpack.c.b16 %v358, %v356
    %v403 = vpack.c.b16 %v361, %v359
    %v404 = vpack.c.b16 %v362, %v360
    %v405 = vpack.c.b16 %v365, %v363
    %v406 = vpack.c.b16 %v366, %v364
    %v407 = vpack.c.b16 %v369, %v367
    %v408 = vpack.c.b16 %v370, %v368
    %v409 = vpack.c.b16 %v373, %v371
    %v410 = vpack.c.b16 %v374, %v372
    %v411 = vpack.c.b16 %v377, %v375
    %v412 = vpack.c.b16 %v378, %v376
    %v413 = vpack.c.b16 %v381, %v379
    %v414 = vpack.c.b16 %v382, %v380
    %447 = vmatprep.subr.bf16.mxu0 %v384
    %448 = vmatpush1.bf16.msra.mxu0 %v383
    %449 = vmatprep.subr.bf16.mxu0 %v386
    %450 = vmatpush1.bf16.msra.mxu0 %v385
    %451 = vmatprep.subr.bf16.mxu0 %v388
    %452 = vmatpush1.bf16.msra.mxu0 %v387
    %453 = vmatprep.subr.bf16.mxu0 %v390
    %454 = vmatpush1.bf16.msra.mxu0 %v389
    %455 = vmatprep.subr.bf16.mxu0 %v392
    %456 = vmatpush1.bf16.msra.mxu0 %v391
    %457 = vmatprep.subr.bf16.mxu0 %v394
    %458 = vmatpush1.bf16.msra.mxu0 %v393
    %459 = vmatprep.subr.bf16.mxu0 %v396
    %460 = vmatpush1.bf16.msra.mxu0 %v395
    %461 = vmatprep.subr.bf16.mxu0 %v398
    %462 = vmatpush1.bf16.msra.mxu0 %v397
    %463 = vmatprep.subr.bf16.mxu0 %v400
    %464 = vmatpush1.bf16.msra.mxu0 %v399
    %465 = vmatprep.subr.bf16.mxu0 %v402
    %466 = vmatpush1.bf16.msra.mxu0 %v401
    %467 = vmatprep.subr.bf16.mxu0 %v404
    %468 = vmatpush1.bf16.msra.mxu0 %v403
    %469 = vmatprep.subr.bf16.mxu0 %v406
    %470 = vmatpush1.bf16.msra.mxu0 %v405
    %471 = vmatprep.subr.bf16.mxu0 %v408
    %472 = vmatpush1.bf16.msra.mxu0 %v407
    %473 = vmatprep.subr.bf16.mxu0 %v410
    %474 = vmatpush1.bf16.msra.mxu0 %v409
    %475 = vmatprep.subr.bf16.mxu0 %v412
    %476 = vmatpush1.bf16.msra.mxu0 %v411
    %477 = vmatprep.subr.bf16.mxu0 %v414
    %478 = vmatpush1.bf16.msra.mxu0 %v413
    %479 = vmatprep.mubr.bf16.mxu0 %v242
    %480 = vmatmul.mubr.bf16.gmra.mrb[0].mxu0 %v241
    %v481 = vpop.f32.mrb[0].mxu0
    %v482 = vadd.f32 %v280, %v481
    %v483 = vpop.f32.mrb[0].mxu0
    %v484 = vadd.f32 %v284, %v483
    %v485 = vpop.f32.mrb[0].mxu0
    %v486 = vadd.f32 %v280, %v485
    %v487 = vpop.f32.mrb[0].mxu0
    %v488 = vadd.f32 %v284, %v487
    %489 = vdwg.mxu0
    %v490 = vmax.f32 %v482, 0.0
    %v491 = vmax.f32 %v484, 0.0
    %v492 = vmax.f32 %v486, 0.0
    %v493 = vmax.f32 %v488, 0.0
    %v494 = vpack.c.bf16 %v492, %v490
    %v495 = vpack.c.bf16 %v493, %v491
    %v496 = vld [vmem:[#allocation8] sm:$0xf]
    %v497 = vld [vmem:[#allocation8 + $0x4] sm:$0xf]
    %v498 = vld [vmem:[#allocation8 + $0x8] sm:$0xf]
    %v499 = vld [vmem:[#allocation8 + $0xc] sm:$0xf]
    %v500 = vld [vmem:[#allocation8 + $0x10] sm:$0xf]
    %v501 = vld [vmem:[#allocation8 + $0x14] sm:$0xf]
    %v502 = vld [vmem:[#allocation8 + $0x18] sm:$0xf]
    %v503 = vld [vmem:[#allocation8 + $0x1c] sm:$0xf]
    %v504 = vld [vmem:[#allocation8 + $0x20] sm:$0xf]
    %v505 = vld [vmem:[#allocation8 + $0x24] sm:$0xf]
    %v506 = vld [vmem:[#allocation8 + $0x28] sm:$0xf]
    %v507 = vld [vmem:[#allocation8 + $0x2c] sm:$0xf]
    %v508 = vld [vmem:[#allocation8 + $0x30] sm:$0xf]
    %v509 = vld [vmem:[#allocation8 + $0x34] sm:$0xf]
    %v510 = vld [vmem:[#allocation8 + $0x38] sm:$0xf]
    %v511 = vld [vmem:[#allocation8 + $0x3c] sm:$0xf]
    %v512 = vld [vmem:[#allocation8 + $0x40] sm:$0xf]
    %v513 = vld [vmem:[#allocation8 + $0x44] sm:$0xf]
    %v514 = vld [vmem:[#allocation8 + $0x48] sm:$0xf]
    %v515 = vld [vmem:[#allocation8 + $0x4c] sm:$0xf]
    %v516 = vld [vmem:[#allocation8 + $0x50] sm:$0xf]
    %v517 = vld [vmem:[#allocation8 + $0x54] sm:$0xf]
    %v518 = vld [vmem:[#allocation8 + $0x58] sm:$0xf]
    %v519 = vld [vmem:[#allocation8 + $0x5c] sm:$0xf]
    %v520 = vld [vmem:[#allocation8 + $0x60] sm:$0xf]
    %v521 = vld [vmem:[#allocation8 + $0x64] sm:$0xf]
    %v522 = vld [vmem:[#allocation8 + $0x68] sm:$0xf]
    %v523 = vld [vmem:[#allocation8 + $0x6c] sm:$0xf]
    %v524 = vld [vmem:[#allocation8 + $0x70] sm:$0xf]
    %v525 = vld [vmem:[#allocation8 + $0x74] sm:$0xf]
    %v526 = vld [vmem:[#allocation8 + $0x78] sm:$0xf]
    %v527 = vld [vmem:[#allocation8 + $0x7c] sm:$0xf]
    %v528 = vld [vmem:[%s6] sm:$0x1]
    %v530 = vlaneseq
    %v531 = vshrl.u32 %v530, 7
    %v532 = vsub.s32 0, %v531
    %v533 = vrot.slane %v528, %v532
    %v567 = vunpack.c.l.b16 %v496
    %v568 = vunpack.c.l.b16 %v497
    %v569 = vunpack.c.l.b16 %v498
    %v570 = vunpack.c.l.b16 %v499
    %v571 = vunpack.c.l.b16 %v500
    %v572 = vunpack.c.l.b16 %v501
    %v573 = vunpack.c.l.b16 %v502
    %v574 = vunpack.c.l.b16 %v503
    %v575 = vunpack.c.l.b16 %v504
    %v576 = vunpack.c.l.b16 %v505
    %v577 = vunpack.c.l.b16 %v506
    %v578 = vunpack.c.l.b16 %v507
    %v579 = vunpack.c.l.b16 %v508
    %v580 = vunpack.c.l.b16 %v509
    %v581 = vunpack.c.l.b16 %v510
    %v582 = vunpack.c.l.b16 %v511
    %v583 = vunpack.c.l.b16 %v512
    %v584 = vunpack.c.l.b16 %v513
    %v585 = vunpack.c.l.b16 %v514
    %v586 = vunpack.c.l.b16 %v515
    %v587 = vunpack.c.l.b16 %v516
    %v588 = vunpack.c.l.b16 %v517
    %v589 = vunpack.c.l.b16 %v518
    %v590 = vunpack.c.l.b16 %v519
    %v591 = vunpack.c.l.b16 %v520
    %v592 = vunpack.c.l.b16 %v521
    %v593 = vunpack.c.l.b16 %v522
    %v594 = vunpack.c.l.b16 %v523
    %v595 = vunpack.c.l.b16 %v524
    %v596 = vunpack.c.l.b16 %v525
    %v597 = vunpack.c.l.b16 %v526
    %v598 = vunpack.c.l.b16 %v527
    %v599 = vpack.c.b16 %v568, %v567
    %v600 = vpack.c.b16 %v570, %v569
    %v601 = vpack.c.b16 %v572, %v571
    %v602 = vpack.c.b16 %v574, %v573
    %v603 = vpack.c.b16 %v576, %v575
    %v604 = vpack.c.b16 %v578, %v577
    %v605 = vpack.c.b16 %v580, %v579
    %v606 = vpack.c.b16 %v582, %v581
    %v607 = vpack.c.b16 %v584, %v583
    %v608 = vpack.c.b16 %v586, %v585
    %v609 = vpack.c.b16 %v588, %v587
    %v610 = vpack.c.b16 %v590, %v589
    %v611 = vpack.c.b16 %v592, %v591
    %v612 = vpack.c.b16 %v594, %v593
    %v613 = vpack.c.b16 %v596, %v595
    %v614 = vpack.c.b16 %v598, %v597
    %631 = vmatprep.subr.bf16.mxu0 0
    %632 = vmatpush1.bf16.msra.mxu0 %v599
    %633 = vmatprep.subr.bf16.mxu0 0
    %634 = vmatpush1.bf16.msra.mxu0 %v600
    %635 = vmatprep.subr.bf16.mxu0 0
    %636 = vmatpush1.bf16.msra.mxu0 %v601
    %637 = vmatprep.subr.bf16.mxu0 0
    %638 = vmatpush1.bf16.msra.mxu0 %v602
    %639 = vmatprep.subr.bf16.mxu0 0
    %640 = vmatpush1.bf16.msra.mxu0 %v603
    %641 = vmatprep.subr.bf16.mxu0 0
    %642 = vmatpush1.bf16.msra.mxu0 %v604
    %643 = vmatprep.subr.bf16.mxu0 0
    %644 = vmatpush1.bf16.msra.mxu0 %v605
    %645 = vmatprep.subr.bf16.mxu0 0
    %646 = vmatpush1.bf16.msra.mxu0 %v606
    %647 = vmatprep.subr.bf16.mxu0 0
    %648 = vmatpush1.bf16.msra.mxu0 %v607
    %649 = vmatprep.subr.bf16.mxu0 0
    %650 = vmatpush1.bf16.msra.mxu0 %v608
    %651 = vmatprep.subr.bf16.mxu0 0
    %652 = vmatpush1.bf16.msra.mxu0 %v609
    %653 = vmatprep.subr.bf16.mxu0 0
    %654 = vmatpush1.bf16.msra.mxu0 %v610
    %655 = vmatprep.subr.bf16.mxu0 0
    %656 = vmatpush1.bf16.msra.mxu0 %v611
    %657 = vmatprep.subr.bf16.mxu0 0
    %658 = vmatpush1.bf16.msra.mxu0 %v612
    %659 = vmatprep.subr.bf16.mxu0 0
    %660 = vmatpush1.bf16.msra.mxu0 %v613
    %661 = vmatprep.subr.bf16.mxu0 0
    %662 = vmatpush1.bf16.msra.mxu0 %v614
    %663 = vmatprep.mubr.bf16.mxu0 %v495
    %664 = vmatmul.mubr.bf16.gmra.mrb[0].mxu0 %v494
    %v665 = vpop.f32.mrb[0].mxu0
    %v666 = vadd.f32 %v533, %v665
    %v667 = vpop.f32.mrb[0].mxu0
    %v668 = vpop.f32.mrb[0].mxu0
    %v669 = vadd.f32 %v533, %v668
    %v670 = vpop.f32.mrb[0].mxu0
    %671 = vdwg.mxu0
    %672 = vst [vmem:[#allocation10] sm:$0xff] %v666
    %673 = vst [vmem:[#allocation10 + $0x8] sm:$0xff] %v669
    // Predicated region
    $region46: #{tpu_custom_call.1} parent=1 // pred_check
      _
    $region47: #{tpu_custom_call.1} parent=1 // pred_check_branch
      %675 = sbr.rel (0) target = $region49
    $region48: #{tpu_custom_call.1} parent=1 // pred_region
      %s677 = ssub.s32 256, 256
      %678 = vsyncadd [#allocation4], %s677
      %s679 = sshll.u32 [#allocation10], 4
      %s680 = int_to_ptr.vmem [resolvable:$true] %s679
      %685 = dma.vmem_to_hbm [thread:$0]  %s680, 256, %s7, [#allocation4], 128, 128, 8
    $region49: #{tpu_custom_call.1} parent=1 // pred_fallthru
      _
    // Predicated region
    $region50: #{tpu_custom_call.1} parent=1 // pred_check
      _
    $region51: #{tpu_custom_call.1} parent=1 // pred_check_branch
      %687 = sbr.rel (0) target = $region53
    $region52: #{tpu_custom_call.1} parent=1 // pred_region
      %688 = dma.done [#allocation4], 256
    $region53: #{tpu_custom_call.1} parent=1 // pred_fallthru
      _
    %689 = vsyncpa [#allocation3], 1
    %690 = vsyncpa [#allocation6], 1
    %691 = vsyncpa [#allocation9], 1
    %692 = vsyncpa [#allocation4], 1

// kernel: tpu_custom_call.1
$region0: #{tpu_custom_call.1}
  #allocation0 [shape = 'u32[]', space=smem, size = 0x4, offset = 0x4, fixed_abs, tag = 'smem constant byte address 0x4 - core index']
  #allocation1 [shape = 'u32[144,128]{1,0:T(1,128)}', space=vmem, size = 0x12000, scoped, tag = 'internal scratch']
  %s0 = inlined_call_operand.hbm [shape: f32[16,128], index: 0, kind: input, shape index: {}]
  %s1 = inlined_call_operand.hbm [shape: bf16[128,256], index: 1, kind: input, shape index: {}]
  %s2 = inlined_call_operand.vmem [shape: f32[1,256], index: 2, kind: input, shape index: {}]
  %s3 = inlined_call_operand.hbm [shape: bf16[256,256], index: 3, kind: input, shape index: {}]
  %s4 = inlined_call_operand.vmem [shape: f32[1,256], index: 4, kind: input, shape index: {}]
  %s5 = inlined_call_operand.hbm [shape: bf16[256,128], index: 5, kind: input, shape index: {}]
  %s6 = inlined_call_operand.vmem [shape: f32[1,128], index: 6, kind: input, shape index: {}]
  %s7 = inlined_call_operand.hbm [shape: f32[16,128], index: 7, kind: output, shape index: {}]
  %s8 = sld [smem:[#allocation0]]
  $region54: #{tpu_custom_call.1} parent=0
    _
  %s10 = ssub.s32 1, %s8
  %s11 = scalar_select 0, %s10, %s8
  $region1: #{tpu_custom_call.1} parent=0
    #allocation2 [shape = 'u8[8192]{0}', space=vmem, size = 0x2000, scoped, tag = 'input window, operand 0, single buffered']
    #allocation3 [shape = 's32[1]{0}', space=sflag, size = 0x4, scoped, tag = 'scoped memory for tpu_custom_call.1']
    #allocation4 [shape = 's32[1]{0}', space=sflag, size = 0x4, scoped, tag = 'scoped memory for tpu_custom_call.1']
    #allocation5 [shape = 'u8[65536]{0}', space=vmem, size = 0x10000, scoped, tag = 'input window, operand 1, single buffered']
    #allocation6 [shape = 's32[1]{0}', space=sflag, size = 0x4, scoped, tag = 'scoped memory for tpu_custom_call.1']
    #allocation7 [shape = 'u8[131072]{0}', space=vmem, size = 0x20000, scoped, tag = 'input window, operand 3, single buffered']
    #allocation8 [shape = 'u8[65536]{0}', space=vmem, size = 0x10000, scoped, tag = 'input window, operand 5, single buffered']
    #allocation9 [shape = 's32[1]{0}', space=sflag, size = 0x4, scoped, tag = 'scoped memory for tpu_custom_call.1']
    #allocation10 [shape = 'u8[8192]{0}', space=vmem, size = 0x2000, scoped, tag = 'output window, operand 0, single buffered']
    %12 = vsyncpa [#allocation3], 0
    %13 = vsyncpa [#allocation6], 0
    %14 = vsyncpa [#allocation9], 0
    %15 = vsyncpa [#allocation4], 0
    // Predicated region
    $region2: #{tpu_custom_call.1} parent=1 // pred_check
      _
    $region3: #{tpu_custom_call.1} parent=1 // pred_check_branch
      %17 = sbr.rel (0) target = $region5
    $region4: #{tpu_custom_call.1} parent=1 // pred_region
      %s19 = ssub.s32 256, 256
      %20 = vsyncadd [#allocation3], %s19
      %s21 = sshll.u32 [#allocation2], 4
      %s22 = int_to_ptr.vmem [resolvable:$true] %s21
      %27 = dma.hbm_to_vmem [thread:$0]  %s0, 256, %s22, [#allocation3], 128, 128, 8
    $region5: #{tpu_custom_call.1} parent=1 // pred_fallthru
      _
    // Predicated region
    $region6: #{tpu_custom_call.1} parent=1 // pred_check
      _
    $region7: #{tpu_custom_call.1} parent=1 // pred_check_branch
      %29 = sbr.rel (0) target = $region9
    $region8: #{tpu_custom_call.1} parent=1 // pred_region
      %s31 = ssub.s32 2048, 2048
      %32 = vsyncadd [#allocation6], %s31
      %s33 = sshll.u32 [#allocation5], 4
      %s34 = int_to_ptr.vmem [resolvable:$true] %s33
      %39 = dma.hbm_to_vmem [thread:$0]  %s1, 2048, %s34, [#allocation6], 128, 128, 8
    $region9: #{tpu_custom_call.1} parent=1 // pred_fallthru
      _
    // Predicated region
    $region10: #{tpu_custom_call.1} parent=1 // pred_check
      _
    $region11: #{tpu_custom_call.1} parent=1 // pred_check_branch
      %41 = sbr.rel (0) target = $region13
    $region12: #{tpu_custom_call.1} parent=1 // pred_region
      _
    $region13: #{tpu_custom_call.1} parent=1 // pred_fallthru
      _
    // Predicated region
    $region14: #{tpu_custom_call.1} parent=1 // pred_check
      _
    $region15: #{tpu_custom_call.1} parent=1 // pred_check_branch
      %43 = sbr.rel (0) target = $region17
    $region16: #{tpu_custom_call.1} parent=1 // pred_region
      %s45 = ssub.s32 4096, 4096
      %46 = vsyncadd [#allocation6], %s45
      %s47 = sshll.u32 [#allocation7], 4
      %s48 = int_to_ptr.vmem [resolvable:$true] %s47
      %53 = dma.hbm_to_vmem [thread:$0]  %s3, 4096, %s48, [#allocation6], 128, 128, 8
    $region17: #{tpu_custom_call.1} parent=1 // pred_fallthru
      _
    // Predicated region
    $region18: #{tpu_custom_call.1} parent=1 // pred_check
      _
    $region19: #{tpu_custom_call.1} parent=1 // pred_check_branch
      %55 = sbr.rel (0) target = $region21
    $region20: #{tpu_custom_call.1} parent=1 // pred_region
      _
    $region21: #{tpu_custom_call.1} parent=1 // pred_fallthru
      _
    // Predicated region
    $region22: #{tpu_custom_call.1} parent=1 // pred_check
      _
    $region23: #{tpu_custom_call.1} parent=1 // pred_check_branch
      %57 = sbr.rel (0) target = $region25
    $region24: #{tpu_custom_call.1} parent=1 // pred_region
      %s59 = ssub.s32 2048, 2048
      %60 = vsyncadd [#allocation9], %s59
      %s61 = sshll.u32 [#allocation8], 4
      %s62 = int_to_ptr.vmem [resolvable:$true] %s61
      %67 = dma.hbm_to_vmem [thread:$0]  %s5, 2048, %s62, [#allocation9], 64, 64, 4
    $region25: #{tpu_custom_call.1} parent=1 // pred_fallthru
      _
    // Predicated region
    $region26: #{tpu_custom_call.1} parent=1 // pred_check
      _
    $region27: #{tpu_custom_call.1} parent=1 // pred_check_branch
      %69 = sbr.rel (0) target = $region29
    $region28: #{tpu_custom_call.1} parent=1 // pred_region
      _
    $region29: #{tpu_custom_call.1} parent=1 // pred_fallthru
      _
    // Predicated region
    $region30: #{tpu_custom_call.1} parent=1 // pred_check
      _
    $region31: #{tpu_custom_call.1} parent=1 // pred_check_branch
      %71 = sbr.rel (0) target = $region33
    $region32: #{tpu_custom_call.1} parent=1 // pred_region
      %72 = dma.done [#allocation3], 256
    $region33: #{tpu_custom_call.1} parent=1 // pred_fallthru
      _
    // Predicated region
    $region34: #{tpu_custom_call.1} parent=1 // pred_check
      _
    $region35: #{tpu_custom_call.1} parent=1 // pred_check_branch
      %74 = sbr.rel (0) target = $region37
    $region36: #{tpu_custom_call.1} parent=1 // pred_region
      %75 = dma.done [#allocation6], 2048
    $region37: #{tpu_custom_call.1} parent=1 // pred_fallthru
      _
    // Predicated region
    $region38: #{tpu_custom_call.1} parent=1 // pred_check
      _
    $region39: #{tpu_custom_call.1} parent=1 // pred_check_branch
      %77 = sbr.rel (0) target = $region41
    $region40: #{tpu_custom_call.1} parent=1 // pred_region
      %78 = dma.done [#allocation6], 4096
    $region41: #{tpu_custom_call.1} parent=1 // pred_fallthru
      _
    // Predicated region
    $region42: #{tpu_custom_call.1} parent=1 // pred_check
      _
    $region43: #{tpu_custom_call.1} parent=1 // pred_check_branch
      %80 = sbr.rel (0) target = $region45
    $region44: #{tpu_custom_call.1} parent=1 // pred_region
      %81 = dma.done [#allocation9], 2048
    $region45: #{tpu_custom_call.1} parent=1 // pred_fallthru
      _
    %v83 = vld [vmem:[#allocation2] sm:$0xff]
    %v84 = vld [vmem:[#allocation2 + $0x8] sm:$0xff]
    %v85 = vpack.c.bf16 %v84, %v83
    %v86 = vld [vmem:[#allocation5] sm:$0xff]
    %v87 = vld [vmem:[#allocation5 + $0x8] sm:$0xff]
    %v88 = vld [vmem:[#allocation5 + $0x10] sm:$0xff]
    %v89 = vld [vmem:[#allocation5 + $0x18] sm:$0xff]
    %v90 = vld [vmem:[#allocation5 + $0x20] sm:$0xff]
    %v91 = vld [vmem:[#allocation5 + $0x28] sm:$0xff]
    %v92 = vld [vmem:[#allocation5 + $0x30] sm:$0xff]
    %v93 = vld [vmem:[#allocation5 + $0x38] sm:$0xff]
    %v94 = vld [vmem:[#allocation5 + $0x40] sm:$0xff]
    %v95 = vld [vmem:[#allocation5 + $0x48] sm:$0xff]
    %v96 = vld [vmem:[#allocation5 + $0x50] sm:$0xff]
    %v97 = vld [vmem:[#allocation5 + $0x58] sm:$0xff]
    %v98 = vld [vmem:[#allocation5 + $0x60] sm:$0xff]
    %v99 = vld [vmem:[#allocation5 + $0x68] sm:$0xff]
    %v100 = vld [vmem:[#allocation5 + $0x70] sm:$0xff]
    %v101 = vld [vmem:[#allocation5 + $0x78] sm:$0xff]
    %v102 = vld [vmem:[%s2] sm:$0x3]
    %v104 = vlaneseq
    %v105 = vshrl.u32 %v104, 7
    %v106 = vsub.s32 0, %v105
    %v107 = vrot.slane %v102, %v106
    %v108 = vlaneseq
    %v109 = vshrl.u32 %v108, 7
    %v110 = vsub.s32 1, %v109
    %v111 = vrot.slane %v102, %v110
    %v130 = vunpack.c.l.b16 %v86
    %v131 = vunpack.c.h.b16 %v86
    %v132 = vunpack.c.l.b16 %v87
    %v133 = vunpack.c.h.b16 %v87
    %v134 = vunpack.c.l.b16 %v88
    %v135 = vunpack.c.h.b16 %v88
    %v136 = vunpack.c.l.b16 %v89
    %v137 = vunpack.c.h.b16 %v89
    %v138 = vunpack.c.l.b16 %v90
    %v139 = vunpack.c.h.b16 %v90
    %v140 = vunpack.c.l.b16 %v91
    %v141 = vunpack.c.h.b16 %v91
    %v142 = vunpack.c.l.b16 %v92
    %v143 = vunpack.c.h.b16 %v92
    %v144 = vunpack.c.l.b16 %v93
    %v145 = vunpack.c.h.b16 %v93
    %v146 = vunpack.c.l.b16 %v94
    %v147 = vunpack.c.h.b16 %v94
    %v148 = vunpack.c.l.b16 %v95
    %v149 = vunpack.c.h.b16 %v95
    %v150 = vunpack.c.l.b16 %v96
    %v151 = vunpack.c.h.b16 %v96
    %v152 = vunpack.c.l.b16 %v97
    %v153 = vunpack.c.h.b16 %v97
    %v154 = vunpack.c.l.b16 %v98
    %v155 = vunpack.c.h.b16 %v98
    %v156 = vunpack.c.l.b16 %v99
    %v157 = vunpack.c.h.b16 %v99
    %v158 = vunpack.c.l.b16 %v100
    %v159 = vunpack.c.h.b16 %v100
    %v160 = vunpack.c.l.b16 %v101
    %v161 = vunpack.c.h.b16 %v101
    %v162 = vpack.c.b16 %v132, %v130
    %v163 = vpack.c.b16 %v133, %v131
    %v164 = vpack.c.b16 %v136, %v134
    %v165 = vpack.c.b16 %v137, %v135
    %v166 = vpack.c.b16 %v140, %v138
    %v167 = vpack.c.b16 %v141, %v139
    %v168 = vpack.c.b16 %v144, %v142
    %v169 = vpack.c.b16 %v145, %v143
    %v170 = vpack.c.b16 %v148, %v146
    %v171 = vpack.c.b16 %v149, %v147
    %v172 = vpack.c.b16 %v152, %v150
    %v173 = vpack.c.b16 %v153, %v151
    %v174 = vpack.c.b16 %v156, %v154
    %v175 = vpack.c.b16 %v157, %v155
    %v176 = vpack.c.b16 %v160, %v158
    %v177 = vpack.c.b16 %v161, %v159
    %194 = vmatprep.subr.bf16.mxu0 %v163
    %195 = vmatpush1.bf16.msra.mxu0 %v162
    %196 = vmatprep.subr.bf16.mxu0 %v165
    %197 = vmatpush1.bf16.msra.mxu0 %v164
    %198 = vmatprep.subr.bf16.mxu0 %v167
    %199 = vmatpush1.bf16.msra.mxu0 %v166
    %200 = vmatprep.subr.bf16.mxu0 %v169
    %201 = vmatpush1.bf16.msra.mxu0 %v168
    %202 = vmatprep.subr.bf16.mxu0 %v171
    %203 = vmatpush1.bf16.msra.mxu0 %v170
    %204 = vmatprep.subr.bf16.mxu0 %v173
    %205 = vmatpush1.bf16.msra.mxu0 %v172
    %206 = vmatprep.subr.bf16.mxu0 %v175
    %207 = vmatpush1.bf16.msra.mxu0 %v174
    %208 = vmatprep.subr.bf16.mxu0 %v177
    %209 = vmatpush1.bf16.msra.mxu0 %v176
    %210 = vmatprep.subr.bf16.mxu0 0
    %211 = vmatpush1.bf16.msra.mxu0 0
    %212 = vmatprep.subr.bf16.mxu0 0
    %213 = vmatpush1.bf16.msra.mxu0 0
    %214 = vmatprep.subr.bf16.mxu0 0
    %215 = vmatpush1.bf16.msra.mxu0 0
    %216 = vmatprep.subr.bf16.mxu0 0
    %217 = vmatpush1.bf16.msra.mxu0 0
    %218 = vmatprep.subr.bf16.mxu0 0
    %219 = vmatpush1.bf16.msra.mxu0 0
    %220 = vmatprep.subr.bf16.mxu0 0
    %221 = vmatpush1.bf16.msra.mxu0 0
    %222 = vmatprep.subr.bf16.mxu0 0
    %223 = vmatpush1.bf16.msra.mxu0 0
    %224 = vmatprep.subr.bf16.mxu0 0
    %225 = vmatpush1.bf16.msra.mxu0 0
    %226 = vmatprep.mubr.bf16.mxu0 0
    %227 = vmatmul.mubr.bf16.gmra.mrb[0].mxu0 %v85
    %v228 = vpop.f32.mrb[0].mxu0
    %v229 = vadd.f32 %v107, %v228
    %v230 = vpop.f32.mrb[0].mxu0
    %v231 = vadd.f32 %v111, %v230
    %v232 = vpop.f32.mrb[0].mxu0
    %v233 = vadd.f32 %v107, %v232
    %v234 = vpop.f32.mrb[0].mxu0
    %v235 = vadd.f32 %v111, %v234
    %236 = vdwg.mxu0
    %v237 = vmax.f32 %v229, 0.0
    %v238 = vmax.f32 %v231, 0.0
    %v239 = vmax.f32 %v233, 0.0
    %v240 = vmax.f32 %v235, 0.0
    %v241 = vpack.c.bf16 %v239, %v237
    %v242 = vpack.c.bf16 %v240, %v238
    %v243 = vld [vmem:[#allocation7] sm:$0xff]
    %v244 = vld [vmem:[#allocation7 + $0x8] sm:$0xff]
    %v245 = vld [vmem:[#allocation7 + $0x10] sm:$0xff]
    %v246 = vld [vmem:[#allocation7 + $0x18] sm:$0xff]
    %v247 = vld [vmem:[#allocation7 + $0x20] sm:$0xff]
    %v248 = vld [vmem:[#allocation7 + $0x28] sm:$0xff]
    %v249 = vld [vmem:[#allocation7 + $0x30] sm:$0xff]
    %v250 = vld [vmem:[#allocation7 + $0x38] sm:$0xff]
    %v251 = vld [vmem:[#allocation7 + $0x40] sm:$0xff]
    %v252 = vld [vmem:[#allocation7 + $0x48] sm:$0xff]
    %v253 = vld [vmem:[#allocation7 + $0x50] sm:$0xff]
    %v254 = vld [vmem:[#allocation7 + $0x58] sm:$0xff]
    %v255 = vld [vmem:[#allocation7 + $0x60] sm:$0xff]
    %v256 = vld [vmem:[#allocation7 + $0x68] sm:$0xff]
    %v257 = vld [vmem:[#allocation7 + $0x70] sm:$0xff]
    %v258 = vld [vmem:[#allocation7 + $0x78] sm:$0xff]
    %v259 = vld [vmem:[#allocation7 + $0x80] sm:$0xff]
    %v260 = vld [vmem:[#allocation7 + $0x88] sm:$0xff]
    %v261 = vld [vmem:[#allocation7 + $0x90] sm:$0xff]
    %v262 = vld [vmem:[#allocation7 + $0x98] sm:$0xff]
    %v263 = vld [vmem:[#allocation7 + $0xa0] sm:$0xff]
    %v264 = vld [vmem:[#allocation7 + $0xa8] sm:$0xff]
    %v265 = vld [vmem:[#allocation7 + $0xb0] sm:$0xff]
    %v266 = vld [vmem:[#allocation7 + $0xb8] sm:$0xff]
    %v267 = vld [vmem:[#allocation7 + $0xc0] sm:$0xff]
    %v268 = vld [vmem:[#allocation7 + $0xc8] sm:$0xff]
    %v269 = vld [vmem:[#allocation7 + $0xd0] sm:$0xff]
    %v270 = vld [vmem:[#allocation7 + $0xd8] sm:$0xff]
    %v271 = vld [vmem:[#allocation7 + $0xe0] sm:$0xff]
    %v272 = vld [vmem:[#allocation7 + $0xe8] sm:$0xff]
    %v273 = vld [vmem:[#allocation7 + $0xf0] sm:$0xff]
    %v274 = vld [vmem:[#allocation7 + $0xf8] sm:$0xff]
    %v275 = vld [vmem:[%s4] sm:$0x3]
    %v277 = vlaneseq
    %v278 = vshrl.u32 %v277, 7
    %v279 = vsub.s32 0, %v278
    %v280 = vrot.slane %v275, %v279
    %v281 = vlaneseq
    %v282 = vshrl.u32 %v281, 7
    %v283 = vsub.s32 1, %v282
    %v284 = vrot.slane %v275, %v283
    %v319 = vunpack.c.l.b16 %v243
    %v320 = vunpack.c.h.b16 %v243
    %v321 = vunpack.c.l.b16 %v244
    %v322 = vunpack.c.h.b16 %v244
    %v323 = vunpack.c.l.b16 %v245
    %v324 = vunpack.c.h.b16 %v245
    %v325 = vunpack.c.l.b16 %v246
    %v326 = vunpack.c.h.b16 %v246
    %v327 = vunpack.c.l.b16 %v247
    %v328 = vunpack.c.h.b16 %v247
    %v329 = vunpack.c.l.b16 %v248
    %v330 = vunpack.c.h.b16 %v248
    %v331 = vunpack.c.l.b16 %v249
    %v332 = vunpack.c.h.b16 %v249
    %v333 = vunpack.c.l.b16 %v250
    %v334 = vunpack.c.h.b16 %v250
    %v335 = vunpack.c.l.b16 %v251
    %v336 = vunpack.c.h.b16 %v251
    %v337 = vunpack.c.l.b16 %v252
    %v338 = vunpack.c.h.b16 %v252
    %v339 = vunpack.c.l.b16 %v253
    %v340 = vunpack.c.h.b16 %v253
    %v341 = vunpack.c.l.b16 %v254
    %v342 = vunpack.c.h.b16 %v254
    %v343 = vunpack.c.l.b16 %v255
    %v344 = vunpack.c.h.b16 %v255
    %v345 = vunpack.c.l.b16 %v256
    %v346 = vunpack.c.h.b16 %v256
    %v347 = vunpack.c.l.b16 %v257
    %v348 = vunpack.c.h.b16 %v257
    %v349 = vunpack.c.l.b16 %v258
    %v350 = vunpack.c.h.b16 %v258
    %v351 = vunpack.c.l.b16 %v259
    %v352 = vunpack.c.h.b16 %v259
    %v353 = vunpack.c.l.b16 %v260
    %v354 = vunpack.c.h.b16 %v260
    %v355 = vunpack.c.l.b16 %v261
    %v356 = vunpack.c.h.b16 %v261
    %v357 = vunpack.c.l.b16 %v262
    %v358 = vunpack.c.h.b16 %v262
    %v359 = vunpack.c.l.b16 %v263
    %v360 = vunpack.c.h.b16 %v263
    %v361 = vunpack.c.l.b16 %v264
    %v362 = vunpack.c.h.b16 %v264
    %v363 = vunpack.c.l.b16 %v265
    %v364 = vunpack.c.h.b16 %v265
    %v365 = vunpack.c.l.b16 %v266
    %v366 = vunpack.c.h.b16 %v266
    %v367 = vunpack.c.l.b16 %v267
    %v368 = vunpack.c.h.b16 %v267
    %v369 = vunpack.c.l.b16 %v268
    %v370 = vunpack.c.h.b16 %v268
    %v371 = vunpack.c.l.b16 %v269
    %v372 = vunpack.c.h.b16 %v269
    %v373 = vunpack.c.l.b16 %v270
    %v374 = vunpack.c.h.b16 %v270
    %v375 = vunpack.c.l.b16 %v271
    %v376 = vunpack.c.h.b16 %v271
    %v377 = vunpack.c.l.b16 %v272
    %v378 = vunpack.c.h.b16 %v272
    %v379 = vunpack.c.l.b16 %v273
    %v380 = vunpack.c.h.b16 %v273
    %v381 = vunpack.c.l.b16 %v274
    %v382 = vunpack.c.h.b16 %v274
    %v383 = vpack.c.b16 %v321, %v319
    %v384 = vpack.c.b16 %v322, %v320
    %v385 = vpack.c.b16 %v325, %v323
    %v386 = vpack.c.b16 %v326, %v324
    %v387 = vpack.c.b16 %v329, %v327
    %v388 = vpack.c.b16 %v330, %v328
    %v389 = vpack.c.b16 %v333, %v331
    %v390 = vpack.c.b16 %v334, %v332
    %v391 = vpack.c.b16 %v337, %v335
    %v392 = vpack.c.b16 %v338, %v336
    %v393 = vpack.c.b16 %v341, %v339
    %v394 = vpack.c.b16 %v342, %v340
    %v395 = vpack.c.b16 %v345, %v343
    %v396 = vpack.c.b16 %v346, %v344
    %v397 = vpack.c.b16 %v349, %v347
    %v398 = vpack.c.b16 %v350, %v348
    %v399 = vpack.c.b16 %v353, %v351
    %v400 = vpack.c.b16 %v354, %v352
    %v401 = vpack.c.b16 %v357, %v355
    %v402 = vpack.c.b16 %v358, %v356
    %v403 = vpack.c.b16 %v361, %v359
    %v404 = vpack.c.b16 %v362, %v360
    %v405 = vpack.c.b16 %v365, %v363
    %v406 = vpack.c.b16 %v366, %v364
    %v407 = vpack.c.b16 %v369, %v367
    %v408 = vpack.c.b16 %v370, %v368
    %v409 = vpack.c.b16 %v373, %v371
    %v410 = vpack.c.b16 %v374, %v372
    %v411 = vpack.c.b16 %v377, %v375
    %v412 = vpack.c.b16 %v378, %v376
    %v413 = vpack.c.b16 %v381, %v379
    %v414 = vpack.c.b16 %v382, %v380
    %447 = vmatprep.subr.bf16.mxu0 %v384
    %448 = vmatpush1.bf16.msra.mxu0 %v383
    %449 = vmatprep.subr.bf16.mxu0 %v386
    %450 = vmatpush1.bf16.msra.mxu0 %v385
    %451 = vmatprep.subr.bf16.mxu0 %v388
    %452 = vmatpush1.bf16.msra.mxu0 %v387
    %453 = vmatprep.subr.bf16.mxu0 %v390
    %454 = vmatpush1.bf16.msra.mxu0 %v389
    %455 = vmatprep.subr.bf16.mxu0 %v392
    %456 = vmatpush1.bf16.msra.mxu0 %v391
    %457 = vmatprep.subr.bf16.mxu0 %v394
    %458 = vmatpush1.bf16.msra.mxu0 %v393
    %459 = vmatprep.subr.bf16.mxu0 %v396
    %460 = vmatpush1.bf16.msra.mxu0 %v395
    %461 = vmatprep.subr.bf16.mxu0 %v398
    %462 = vmatpush1.bf16.msra.mxu0 %v397
    %463 = vmatprep.subr.bf16.mxu0 %v400
    %464 = vmatpush1.bf16.msra.mxu0 %v399
    %465 = vmatprep.subr.bf16.mxu0 %v402
    %466 = vmatpush1.bf16.msra.mxu0 %v401
    %467 = vmatprep.subr.bf16.mxu0 %v404
    %468 = vmatpush1.bf16.msra.mxu0 %v403
    %469 = vmatprep.subr.bf16.mxu0 %v406
    %470 = vmatpush1.bf16.msra.mxu0 %v405
    %471 = vmatprep.subr.bf16.mxu0 %v408
    %472 = vmatpush1.bf16.msra.mxu0 %v407
    %473 = vmatprep.subr.bf16.mxu0 %v410
    %474 = vmatpush1.bf16.msra.mxu0 %v409
    %475 = vmatprep.subr.bf16.mxu0 %v412
    %476 = vmatpush1.bf16.msra.mxu0 %v411
    %477 = vmatprep.subr.bf16.mxu0 %v414
    %478 = vmatpush1.bf16.msra.mxu0 %v413
    %479 = vmatprep.mubr.bf16.mxu0 %v242
    %480 = vmatmul.mubr.bf16.gmra.mrb[0].mxu0 %v241
    %v481 = vpop.f32.mrb[0].mxu0
    %v482 = vadd.f32 %v280, %v481
    %v483 = vpop.f32.mrb[0].mxu0
    %v484 = vadd.f32 %v284, %v483
    %v485 = vpop.f32.mrb[0].mxu0
    %v486 = vadd.f32 %v280, %v485
    %v487 = vpop.f32.mrb[0].mxu0
    %v488 = vadd.f32 %v284, %v487
    %489 = vdwg.mxu0
    %v490 = vmax.f32 %v482, 0.0
    %v491 = vmax.f32 %v484, 0.0
    %v492 = vmax.f32 %v486, 0.0
    %v493 = vmax.f32 %v488, 0.0
    %v494 = vpack.c.bf16 %v492, %v490
    %v495 = vpack.c.bf16 %v493, %v491
    %v496 = vld [vmem:[#allocation8] sm:$0xf]
    %v497 = vld [vmem:[#allocation8 + $0x4] sm:$0xf]
    %v498 = vld [vmem:[#allocation8 + $0x8] sm:$0xf]
    %v499 = vld [vmem:[#allocation8 + $0xc] sm:$0xf]
    %v500 = vld [vmem:[#allocation8 + $0x10] sm:$0xf]
    %v501 = vld [vmem:[#allocation8 + $0x14] sm:$0xf]
    %v502 = vld [vmem:[#allocation8 + $0x18] sm:$0xf]
    %v503 = vld [vmem:[#allocation8 + $0x1c] sm:$0xf]
    %v504 = vld [vmem:[#allocation8 + $0x20] sm:$0xf]
    %v505 = vld [vmem:[#allocation8 + $0x24] sm:$0xf]
    %v506 = vld [vmem:[#allocation8 + $0x28] sm:$0xf]
    %v507 = vld [vmem:[#allocation8 + $0x2c] sm:$0xf]
    %v508 = vld [vmem:[#allocation8 + $0x30] sm:$0xf]
    %v509 = vld [vmem:[#allocation8 + $0x34] sm:$0xf]
    %v510 = vld [vmem:[#allocation8 + $0x38] sm:$0xf]
    %v511 = vld [vmem:[#allocation8 + $0x3c] sm:$0xf]
    %v512 = vld [vmem:[#allocation8 + $0x40] sm:$0xf]
    %v513 = vld [vmem:[#allocation8 + $0x44] sm:$0xf]
    %v514 = vld [vmem:[#allocation8 + $0x48] sm:$0xf]
    %v515 = vld [vmem:[#allocation8 + $0x4c] sm:$0xf]
    %v516 = vld [vmem:[#allocation8 + $0x50] sm:$0xf]
    %v517 = vld [vmem:[#allocation8 + $0x54] sm:$0xf]
    %v518 = vld [vmem:[#allocation8 + $0x58] sm:$0xf]
    %v519 = vld [vmem:[#allocation8 + $0x5c] sm:$0xf]
    %v520 = vld [vmem:[#allocation8 + $0x60] sm:$0xf]
    %v521 = vld [vmem:[#allocation8 + $0x64] sm:$0xf]
    %v522 = vld [vmem:[#allocation8 + $0x68] sm:$0xf]
    %v523 = vld [vmem:[#allocation8 + $0x6c] sm:$0xf]
    %v524 = vld [vmem:[#allocation8 + $0x70] sm:$0xf]
    %v525 = vld [vmem:[#allocation8 + $0x74] sm:$0xf]
    %v526 = vld [vmem:[#allocation8 + $0x78] sm:$0xf]
    %v527 = vld [vmem:[#allocation8 + $0x7c] sm:$0xf]
    %v528 = vld [vmem:[%s6] sm:$0x1]
    %v530 = vlaneseq
    %v531 = vshrl.u32 %v530, 7
    %v532 = vsub.s32 0, %v531
    %v533 = vrot.slane %v528, %v532
    %v567 = vunpack.c.l.b16 %v496
    %v568 = vunpack.c.l.b16 %v497
    %v569 = vunpack.c.l.b16 %v498
    %v570 = vunpack.c.l.b16 %v499
    %v571 = vunpack.c.l.b16 %v500
    %v572 = vunpack.c.l.b16 %v501
    %v573 = vunpack.c.l.b16 %v502
    %v574 = vunpack.c.l.b16 %v503
    %v575 = vunpack.c.l.b16 %v504
    %v576 = vunpack.c.l.b16 %v505
    %v577 = vunpack.c.l.b16 %v506
    %v578 = vunpack.c.l.b16 %v507
    %v579 = vunpack.c.l.b16 %v508
    %v580 = vunpack.c.l.b16 %v509
    %v581 = vunpack.c.l.b16 %v510
    %v582 = vunpack.c.l.b16 %v511
    %v583 = vunpack.c.l.b16 %v512
    %v584 = vunpack.c.l.b16 %v513
    %v585 = vunpack.c.l.b16 %v514
    %v586 = vunpack.c.l.b16 %v515
    %v587 = vunpack.c.l.b16 %v516
    %v588 = vunpack.c.l.b16 %v517
    %v589 = vunpack.c.l.b16 %v518
    %v590 = vunpack.c.l.b16 %v519
    %v591 = vunpack.c.l.b16 %v520
    %v592 = vunpack.c.l.b16 %v521
    %v593 = vunpack.c.l.b16 %v522
    %v594 = vunpack.c.l.b16 %v523
    %v595 = vunpack.c.l.b16 %v524
    %v596 = vunpack.c.l.b16 %v525
    %v597 = vunpack.c.l.b16 %v526
    %v598 = vunpack.c.l.b16 %v527
    %v599 = vpack.c.b16 %v568, %v567
    %v600 = vpack.c.b16 %v570, %v569
    %v601 = vpack.c.b16 %v572, %v571
    %v602 = vpack.c.b16 %v574, %v573
    %v603 = vpack.c.b16 %v576, %v575
    %v604 = vpack.c.b16 %v578, %v577
    %v605 = vpack.c.b16 %v580, %v579
    %v606 = vpack.c.b16 %v582, %v581
    %v607 = vpack.c.b16 %v584, %v583
    %v608 = vpack.c.b16 %v586, %v585
    %v609 = vpack.c.b16 %v588, %v587
    %v610 = vpack.c.b16 %v590, %v589
    %v611 = vpack.c.b16 %v592, %v591
    %v612 = vpack.c.b16 %v594, %v593
    %v613 = vpack.c.b16 %v596, %v595
    %v614 = vpack.c.b16 %v598, %v597
    %631 = vmatprep.subr.bf16.mxu0 0
    %632 = vmatpush1.bf16.msra.mxu0 %v599
    %633 = vmatprep.subr.bf16.mxu0 0
    %634 = vmatpush1.bf16.msra.mxu0 %v600
    %635 = vmatprep.subr.bf16.mxu0 0
    %636 = vmatpush1.bf16.msra.mxu0 %v601
    %637 = vmatprep.subr.bf16.mxu0 0
    %638 = vmatpush1.bf16.msra.mxu0 %v602
    %639 = vmatprep.subr.bf16.mxu0 0
    %640 = vmatpush1.bf16.msra.mxu0 %v603
    %641 = vmatprep.subr.bf16.mxu0 0
    %642 = vmatpush1.bf16.msra.mxu0 %v604
    %643 = vmatprep.subr.bf16.mxu0 0
    %644 = vmatpush1.bf16.msra.mxu0 %v605
    %645 = vmatprep.subr.bf16.mxu0 0
    %646 = vmatpush1.bf16.msra.mxu0 %v606
    %647 = vmatprep.subr.bf16.mxu0 0
    %648 = vmatpush1.bf16.msra.mxu0 %v607
    %649 = vmatprep.subr.bf16.mxu0 0
    %650 = vmatpush1.bf16.msra.mxu0 %v608
    %651 = vmatprep.subr.bf16.mxu0 0
    %652 = vmatpush1.bf16.msra.mxu0 %v609
    %653 = vmatprep.subr.bf16.mxu0 0
    %654 = vmatpush1.bf16.msra.mxu0 %v610
    %655 = vmatprep.subr.bf16.mxu0 0
    %656 = vmatpush1.bf16.msra.mxu0 %v611
    %657 = vmatprep.subr.bf16.mxu0 0
    %658 = vmatpush1.bf16.msra.mxu0 %v612
    %659 = vmatprep.subr.bf16.mxu0 0
    %660 = vmatpush1.bf16.msra.mxu0 %v613
    %661 = vmatprep.subr.bf16.mxu0 0
    %662 = vmatpush1.bf16.msra.mxu0 %v614
    %663 = vmatprep.mubr.bf16.mxu0 %v495
    %664 = vmatmul.mubr.bf16.gmra.mrb[0].mxu0 %v494
    %v665 = vpop.f32.mrb[0].mxu0
    %v666 = vadd.f32 %v533, %v665
    %v667 = vpop.f32.mrb[0].mxu0
    %v668 = vpop.f32.mrb[0].mxu0
    %v669 = vadd.f32 %v533, %v668
    %v670 = vpop.f32.mrb[0].mxu0
    %671 = vdwg.mxu0
    %672 = vst [vmem:[#allocation10] sm:$0xff] %v666
    %673 = vst [vmem:[#allocation10 + $0x8] sm:$0xff] %v669
    // Predicated region
    $region46: #{tpu_custom_call.1} parent=1 // pred_check
      _
    $region47: #{tpu_custom_call.1} parent=1 // pred_check_branch
      %675 = sbr.rel (0) target = $region49
    $region48: #{tpu_custom_call.1} parent=1 // pred_region
      %s677 = ssub.s32 256, 256
      %678 = vsyncadd [#allocation4], %s677
      %s679 = sshll.u32 [#allocation10], 4
      %s680 = int_to_ptr.vmem [resolvable:$true] %s679
      %685 = dma.vmem_to_hbm [thread:$0]  %s680, 256, %s7, [#allocation4], 128, 128, 8
    $region49: #{tpu_custom_call.1} parent=1 // pred_fallthru
      _
    // Predicated region
    $region50: #{tpu_custom_call.1} parent=1 // pred_check
      _
    $region51: #{tpu_custom_call.1} parent=1 // pred_check_branch
      %687 = sbr.rel (0) target = $region53
    $region52: #{tpu_custom_call.1} parent=1 // pred_region
      %688 = dma.done [#allocation4], 256
    $region53: #{tpu_custom_call.1} parent=1 // pred_fallthru
      _
    %689 = vsyncpa [#allocation3], 1
    %690 = vsyncpa [#allocation6], 1
    %691 = vsyncpa [#allocation9], 1
    %692 = vsyncpa [#allocation4], 1

</llo_original>
